<compile_context>
chip_gen: v7x
topology: tpu7x:2x2x1
jax: 0.10.0
libtpu: 0.0.40
codegen_flags: <defaults>
</compile_context>

<pallas_src>
import math

import numpy as np
import jax
import jax.numpy as jnp
from jax.experimental import pallas as pl
from jax.experimental.pallas import tpu as pltpu


def _round_up(x, m):
    return ((x + m - 1) // m) * m


def _cdiv(a, b):
    return -(-a // b)


def _vmem_bytes(rows, cols, itemsize):
    """Conservative VMEM footprint of a (rows, cols) array (vreg padding)."""
    sub = 32 // itemsize          # rows per (8,128) vreg: f32 -> 8, bf16 -> 16
    return _round_up(rows, sub) * _round_up(cols, 128) * itemsize


def _choose_tile_rows(Ho, W, C2, Co2):
    """Output rows per grid step, derived from a VMEM budget (review item)."""
    lane = 128
    # per output row: double-buffered f32 output block + extended input slab
    # + accumulator/dot temporaries (lane dims pad to 128 in VMEM).
    per_row = W * (2 * max(Co2, lane) * 4 + max(C2, lane) * 4 + 2 * max(Co2, lane) * 4)
    budget = 12 * 1024 * 1024     # leave the rest for the resident image + weights
    m = 16 // math.gcd(W, 16)     # keep TH*W a multiple of 16 (sublane / bf16-pack friendly)
    cap = max(m, min(Ho, budget // max(per_row, 1)))
    cap = max(m, (cap // m) * m)
    n_tiles = _cdiv(Ho, cap)
    return _round_up(_cdiv(Ho, n_tiles), m)


# ----------------------------- Pallas kernel ------------------------------ #
def _make_kernel(n_taps, W, kW, TH, halo_rows, n_tiles):
    THW = TH * W

    def kernel(x_ref, w_ref, b_ref, o_ref):
        # x_ref : (1, Lp, C2)       whole padded, flattened image for this batch elem
        # w_ref : (kH*kW, C2, Co2)  block weights, one (C2, Co2) slice per filter tap
        # b_ref : (1, Co2)          fused complex bias row [b_r - b_i | b_r + b_i]
        # o_ref : (1, TH*W, Co2)    TH output rows, extended to the full input width
        if n_tiles == 1:
            base = 0                                            # fully static path
        else:
            base = pl.multiple_of(pl.program_id(1) * THW, 16)   # aligned dynamic start
        # One aligned load that covers this tile plus its (kH, kW) halo.
        ext = x_ref[0, pl.ds(base, THW + halo_rows), :]         # (THW + halo, C2)

        acc = jnp.zeros((THW, o_ref.shape[-1]), jnp.float32)
        for idx in range(n_taps):                               # static unrolled loop
            kh, kw = idx // kW, idx % kW
            r = kh * W + kw                                     # static shift per tap
            acc = acc + jnp.dot(ext[r:r + THW, :], w_ref[idx],
                                preferred_element_type=jnp.float32)
        o_ref[0] = (acc + b_ref[...]).astype(o_ref.dtype)

    return kernel


# ------------------------------- wrapper ----------------------------------- #
def complex_conv2d(x_r, x_i, w_r, w_i, b_r, b_i, *, stride=1, padding=0,
                   dilation=1, groups=1, compute_dtype=jnp.bfloat16,
                   tile_rows=None):
    """x_*: (N, Cin, H, W).  w_*: (Cout, Cin, kH, kW).  b_*: (Cout,)."""
    if (stride, padding, dilation, groups) != (1, 0, 1, 1):
        # TODO(synk): non-default Conv2d hyperparameters are not implemented.
        raise NotImplementedError("only stride=1, padding=0, dilation=1, groups=1")

    N, Cin, H, W = x_r.shape
    Cout, Cin_w, kH, kW = w_r.shape
    assert x_i.shape == x_r.shape and w_i.shape == w_r.shape
    assert Cin_w == Cin and b_r.shape == (Cout,) and b_i.shape == (Cout,)
    assert H >= kH and W >= kW
    Ho, Wo = H - kH + 1, W - kW + 1
    C2, Co2 = 2 * Cin, 2 * Cout
    itemsize = jnp.dtype(compute_dtype).itemsize

    # ---- tiling: TH output rows per grid step (VMEM-budgeted) ---- #
    m = 16 // math.gcd(W, 16)
    if tile_rows is None:
        TH = _choose_tile_rows(Ho, W, C2, Co2)
    else:
        TH = min(_round_up(tile_rows, m), _round_up(Ho, m))
    n_tiles = _cdiv(Ho, TH)
    Hop = TH * n_tiles                       # padded output-row count (junk rows sliced off)
    THW = TH * W
    halo_rows = _round_up((kH - 1) * W + (kW - 1), 8)
    Lp = _round_up(Hop * W + halo_rows, 8)   # padded flattened-spatial extent

    # ---- glue: flattened channels-last image [x_r | x_i] (one XLA pass) ---- #
    x2 = jnp.concatenate([x_r, x_i], axis=1)                 # (N, 2Cin, H, W)
    x2 = jnp.transpose(x2, (0, 2, 3, 1)).reshape(N, H * W, C2)
    x2 = jnp.pad(x2, ((0, 0), (0, Lp - H * W), (0, 0))).astype(compute_dtype)

    # ---- glue: block weights per filter tap and fused complex bias ---- #
    wr = jnp.transpose(w_r, (2, 3, 1, 0))                    # (kH, kW, Cin, Cout)
    wi = jnp.transpose(w_i, (2, 3, 1, 0))
    w_blk = jnp.concatenate(
        [jnp.concatenate([wr, wi], axis=-1),                 # real input channels
         jnp.concatenate([-wi, wr], axis=-1)], axis=2)       # imag input channels
    w_blk = w_blk.reshape(kH * kW, C2, Co2).astype(compute_dtype)

    b_row = jnp.concatenate([b_r - b_i, b_r + b_i]).astype(jnp.float32).reshape(1, Co2)

    # ---- Pallas call: grid over (batch, output-row tiles) ---- #
    kernel = _make_kernel(kH * kW, W, kW, TH, halo_rows, n_tiles)

    flops = 2 * N * Hop * W * (kH * kW * C2) * Co2
    bytes_accessed = int(x2.size * x2.dtype.itemsize
                         + w_blk.size * w_blk.dtype.itemsize
                         + b_row.size * 4
                         + N * Hop * W * Co2 * 4)

    vmem_est = (2 * _vmem_bytes(Lp, C2, itemsize)                 # resident image (2 bufs)
                + 2 * kH * kW * _vmem_bytes(C2, Co2, itemsize)    # weights
                + 2 * _vmem_bytes(1, Co2, 4)                      # bias
                + 2 * _vmem_bytes(THW, Co2, 4)                    # output block (2 bufs)
                + _vmem_bytes(THW + halo_rows, C2, 4)             # ext slab
                + 2 * _vmem_bytes(THW, Co2, 4))                   # acc + dot temp
    vmem_limit = int(min(max(2 * vmem_est, 32 * 2**20), 60 * 2**20))

    out = pl.pallas_call(
        kernel,
        out_shape=jax.ShapeDtypeStruct((N, Hop * W, Co2), jnp.float32),
        grid_spec=pltpu.PrefetchScalarGridSpec(
            num_scalar_prefetch=0,
            grid=(N, n_tiles),
            in_specs=[
                # whole image per batch element; constant over the row-tile axis,
                # so it is DMA'd from HBM exactly once per batch element.
                pl.BlockSpec((1, Lp, C2), lambda n, t: (n, 0, 0)),
                pl.BlockSpec((kH * kW, C2, Co2), lambda n, t: (0, 0, 0)),
                pl.BlockSpec((1, Co2), lambda n, t: (0, 0)),
            ],
            out_specs=pl.BlockSpec((1, THW, Co2), lambda n, t: (n, t, 0)),
        ),
        compiler_params=pltpu.CompilerParams(
            dimension_semantics=("parallel", "parallel"),
            vmem_limit_bytes=vmem_limit),
        cost_estimate=pl.CostEstimate(flops=int(flops), transcendentals=0,
                                      bytes_accessed=bytes_accessed),
    )(x2, w_blk, b_row)

    # ---- slice off junk rows / wrap columns, back to NCHW, split r/i ---- #
    out = out.reshape(N, Hop, W, Co2)[:, :Ho, :Wo, :]
    out = jnp.transpose(out, (0, 3, 1, 2))                   # (N, 2Cout, Ho, Wo)
    return out[:, :Cout], out[:, Cout:]


# ----------------------------- pure-JAX reference -------------------------- #
def _conv2d_ref(x, w, b):
    out = jax.lax.conv_general_dilated(
        x, w, window_strides=(1, 1), padding="VALID",
        dimension_numbers=("NCHW", "OIHW", "NCHW"),
        precision=jax.lax.Precision.HIGHEST)
    return out + b.reshape(1, -1, 1, 1)


if __name__ == "__main__":
    key = jax.random.PRNGKey(0)
    k1, k2, k3, k4, k5, k6 = jax.random.split(key, 6)

    N, Cin, Cout = 2, 4, 4
    H, W = 16, 16
    kH, kW = 3, 3
    Ho, Wo = H - kH + 1, W - kW + 1

    x_r = jax.random.normal(k1, (N, Cin, H, W), jnp.float32)
    x_i = jax.random.normal(k2, (N, Cin, H, W), jnp.float32)

    bound = 1.0 / np.sqrt(Cin * kH * kW)      # PyTorch Conv2d-style init bound
    w_r = jax.random.uniform(k3, (Cout, Cin, kH, kW), jnp.float32, -bound, bound)
    w_i = jax.random.uniform(k4, (Cout, Cin, kH, kW), jnp.float32, -bound, bound)
    b_r = jax.random.uniform(k5, (Cout,), jnp.float32, -bound, bound)
    b_i = jax.random.uniform(k6, (Cout,), jnp.float32, -bound, bound)

    def ref(xr, xi, wr, wi):
        return (_conv2d_ref(xr, wr, b_r) - _conv2d_ref(xi, wi, b_i),
                _conv2d_ref(xi, wr, b_r) + _conv2d_ref(xr, wi, b_i))

    # 1) default bf16-compute path (f32 accumulation), single row-tile
    out_r, out_i = jax.jit(complex_conv2d)(x_r, x_i, w_r, w_i, b_r, b_i)
    jax.block_until_ready((out_r, out_i))
    assert out_r.shape == (N, Cout, Ho, Wo) and out_i.shape == (N, Cout, Ho, Wo)

    q = lambda a: a.astype(jnp.bfloat16).astype(jnp.float32)
    ref_r, ref_i = ref(q(x_r), q(x_i), q(w_r), q(w_i))
    np.testing.assert_allclose(np.asarray(out_r), np.asarray(ref_r), rtol=1e-4, atol=1e-4)
    np.testing.assert_allclose(np.asarray(out_i), np.asarray(ref_i), rtol=1e-4, atol=1e-4)

    # 2) fp32 parity path (reviewer correctness concern: exact-dtype fallback)
    f32_fn = jax.jit(lambda *a: complex_conv2d(*a, compute_dtype=jnp.float32))
    o32_r, o32_i = f32_fn(x_r, x_i, w_r, w_i, b_r, b_i)
    jax.block_until_ready((o32_r, o32_i))
    ref32_r, ref32_i = ref(x_r, x_i, w_r, w_i)
    np.testing.assert_allclose(np.asarray(o32_r), np.asarray(ref32_r), rtol=2e-3, atol=2e-3)
    np.testing.assert_allclose(np.asarray(o32_i), np.asarray(ref32_i), rtol=2e-3, atol=2e-3)

    # 3) multi-row-tile path (exercises the pipelined grid + dynamic row offset)
    tiled_fn = jax.jit(lambda *a: complex_conv2d(*a, tile_rows=8))
    ot_r, ot_i = tiled_fn(x_r, x_i, w_r, w_i, b_r, b_i)
    jax.block_until_ready((ot_r, ot_i))
    np.testing.assert_allclose(np.asarray(ot_r), np.asarray(ref_r), rtol=1e-4, atol=1e-4)
    np.testing.assert_allclose(np.asarray(ot_i), np.asarray(ref_i), rtol=1e-4, atol=1e-4)

    print("KERNEL_OK")
</pallas_src>

<mosaic_0001>
module attributes {stable_mosaic.version = 11 : i64} {
  func.func @kernel(%arg0: i32, %arg1: i32, %arg2: memref<1x264x8xbf16, #tpu.memory_space<vmem>>, %arg3: memref<9x8x8xbf16, #tpu.memory_space<vmem>>, %arg4: memref<1x8xf32, #tpu.memory_space<vmem>>, %arg5: memref<1x224x8xf32, #tpu.memory_space<vmem>>) attributes {dimension_semantics = [#tpu.dimension_semantics<parallel>, #tpu.dimension_semantics<parallel>], iteration_bounds = array<i64: 2, 1>, scalar_prefetch = 0 : i64, scratch_operands = 0 : i64, tpu.core_type = #tpu.core_type<tc>, window_params = [{transform_indices = @transform_0, window_bounds = array<i64: 1, 264, 8>}, {pipeline_mode = #tpu.pipeline_mode<synchronous>, transform_indices = @transform_1, window_bounds = array<i64: 9, 8, 8>}, {pipeline_mode = #tpu.pipeline_mode<synchronous>, transform_indices = @transform_2, window_bounds = array<i64: 1, 8>}, {transform_indices = @transform_3, window_bounds = array<i64: 1, 224, 8>}]} {
    %c0 = arith.constant 0 : index
    %c0_0 = arith.constant 0 : index
    %c0_1 = arith.constant 0 : index
    %0 = vector.load %arg2[%c0, %c0_0, %c0_1] : memref<1x264x8xbf16, #tpu.memory_space<vmem>>, vector<1x264x8xbf16>
    %1 = vector.shape_cast %0 : vector<1x264x8xbf16> to vector<264x8xbf16>
    %cst = arith.constant 0.000000e+00 : f32
    %2 = vector.broadcast %cst : f32 to vector<224x8xf32>
    %3 = vector.extract_strided_slice %1 {offsets = [0, 0], sizes = [224, 8], strides = [1, 1]} : vector<264x8xbf16> to vector<224x8xbf16>
    %c0_2 = arith.constant 0 : index
    %c0_3 = arith.constant 0 : index
    %c0_4 = arith.constant 0 : index
    %4 = vector.load %arg3[%c0_2, %c0_3, %c0_4] : memref<9x8x8xbf16, #tpu.memory_space<vmem>>, vector<1x8x8xbf16>
    %5 = vector.shape_cast %4 : vector<1x8x8xbf16> to vector<8x8xbf16>
    %cst_5 = arith.constant dense<0.000000e+00> : vector<224x8xf32>
    %6 = tpu.matmul %3, %5, %cst_5 {dimension_numbers = #tpu.dot_dimension_numbers<[1], [0], [0], [1], [0, 0, 1, 1], [], []>} : vector<224x8xbf16>, vector<8x8xbf16>, vector<224x8xf32> -> vector<224x8xf32>
    %7 = arith.addf %2, %6 : vector<224x8xf32>
    %8 = vector.extract_strided_slice %1 {offsets = [1, 0], sizes = [224, 8], strides = [1, 1]} : vector<264x8xbf16> to vector<224x8xbf16>
    %c1 = arith.constant 1 : index
    %c0_6 = arith.constant 0 : index
    %c0_7 = arith.constant 0 : index
    %9 = vector.load %arg3[%c1, %c0_6, %c0_7] : memref<9x8x8xbf16, #tpu.memory_space<vmem>>, vector<1x8x8xbf16>
    %10 = vector.shape_cast %9 : vector<1x8x8xbf16> to vector<8x8xbf16>
    %cst_8 = arith.constant dense<0.000000e+00> : vector<224x8xf32>
    %11 = tpu.matmul %8, %10, %cst_8 {dimension_numbers = #tpu.dot_dimension_numbers<[1], [0], [0], [1], [0, 0, 1, 1], [], []>} : vector<224x8xbf16>, vector<8x8xbf16>, vector<224x8xf32> -> vector<224x8xf32>
    %12 = arith.addf %7, %11 : vector<224x8xf32>
    %13 = vector.extract_strided_slice %1 {offsets = [2, 0], sizes = [224, 8], strides = [1, 1]} : vector<264x8xbf16> to vector<224x8xbf16>
    %c2 = arith.constant 2 : index
    %c0_9 = arith.constant 0 : index
    %c0_10 = arith.constant 0 : index
    %14 = vector.load %arg3[%c2, %c0_9, %c0_10] : memref<9x8x8xbf16, #tpu.memory_space<vmem>>, vector<1x8x8xbf16>
    %15 = vector.shape_cast %14 : vector<1x8x8xbf16> to vector<8x8xbf16>
    %cst_11 = arith.constant dense<0.000000e+00> : vector<224x8xf32>
    %16 = tpu.matmul %13, %15, %cst_11 {dimension_numbers = #tpu.dot_dimension_numbers<[1], [0], [0], [1], [0, 0, 1, 1], [], []>} : vector<224x8xbf16>, vector<8x8xbf16>, vector<224x8xf32> -> vector<224x8xf32>
    %17 = arith.addf %12, %16 : vector<224x8xf32>
    %18 = vector.extract_strided_slice %1 {offsets = [16, 0], sizes = [224, 8], strides = [1, 1]} : vector<264x8xbf16> to vector<224x8xbf16>
    %c3 = arith.constant 3 : index
    %c0_12 = arith.constant 0 : index
    %c0_13 = arith.constant 0 : index
    %19 = vector.load %arg3[%c3, %c0_12, %c0_13] : memref<9x8x8xbf16, #tpu.memory_space<vmem>>, vector<1x8x8xbf16>
    %20 = vector.shape_cast %19 : vector<1x8x8xbf16> to vector<8x8xbf16>
    %cst_14 = arith.constant dense<0.000000e+00> : vector<224x8xf32>
    %21 = tpu.matmul %18, %20, %cst_14 {dimension_numbers = #tpu.dot_dimension_numbers<[1], [0], [0], [1], [0, 0, 1, 1], [], []>} : vector<224x8xbf16>, vector<8x8xbf16>, vector<224x8xf32> -> vector<224x8xf32>
    %22 = arith.addf %17, %21 : vector<224x8xf32>
    %23 = vector.extract_strided_slice %1 {offsets = [17, 0], sizes = [224, 8], strides = [1, 1]} : vector<264x8xbf16> to vector<224x8xbf16>
    %c4 = arith.constant 4 : index
    %c0_15 = arith.constant 0 : index
    %c0_16 = arith.constant 0 : index
    %24 = vector.load %arg3[%c4, %c0_15, %c0_16] : memref<9x8x8xbf16, #tpu.memory_space<vmem>>, vector<1x8x8xbf16>
    %25 = vector.shape_cast %24 : vector<1x8x8xbf16> to vector<8x8xbf16>
    %cst_17 = arith.constant dense<0.000000e+00> : vector<224x8xf32>
    %26 = tpu.matmul %23, %25, %cst_17 {dimension_numbers = #tpu.dot_dimension_numbers<[1], [0], [0], [1], [0, 0, 1, 1], [], []>} : vector<224x8xbf16>, vector<8x8xbf16>, vector<224x8xf32> -> vector<224x8xf32>
    %27 = arith.addf %22, %26 : vector<224x8xf32>
    %28 = vector.extract_strided_slice %1 {offsets = [18, 0], sizes = [224, 8], strides = [1, 1]} : vector<264x8xbf16> to vector<224x8xbf16>
    %c5 = arith.constant 5 : index
    %c0_18 = arith.constant 0 : index
    %c0_19 = arith.constant 0 : index
    %29 = vector.load %arg3[%c5, %c0_18, %c0_19] : memref<9x8x8xbf16, #tpu.memory_space<vmem>>, vector<1x8x8xbf16>
    %30 = vector.shape_cast %29 : vector<1x8x8xbf16> to vector<8x8xbf16>
    %cst_20 = arith.constant dense<0.000000e+00> : vector<224x8xf32>
    %31 = tpu.matmul %28, %30, %cst_20 {dimension_numbers = #tpu.dot_dimension_numbers<[1], [0], [0], [1], [0, 0, 1, 1], [], []>} : vector<224x8xbf16>, vector<8x8xbf16>, vector<224x8xf32> -> vector<224x8xf32>
    %32 = arith.addf %27, %31 : vector<224x8xf32>
    %33 = vector.extract_strided_slice %1 {offsets = [32, 0], sizes = [224, 8], strides = [1, 1]} : vector<264x8xbf16> to vector<224x8xbf16>
    %c6 = arith.constant 6 : index
    %c0_21 = arith.constant 0 : index
    %c0_22 = arith.constant 0 : index
    %34 = vector.load %arg3[%c6, %c0_21, %c0_22] : memref<9x8x8xbf16, #tpu.memory_space<vmem>>, vector<1x8x8xbf16>
    %35 = vector.shape_cast %34 : vector<1x8x8xbf16> to vector<8x8xbf16>
    %cst_23 = arith.constant dense<0.000000e+00> : vector<224x8xf32>
    %36 = tpu.matmul %33, %35, %cst_23 {dimension_numbers = #tpu.dot_dimension_numbers<[1], [0], [0], [1], [0, 0, 1, 1], [], []>} : vector<224x8xbf16>, vector<8x8xbf16>, vector<224x8xf32> -> vector<224x8xf32>
    %37 = arith.addf %32, %36 : vector<224x8xf32>
    %38 = vector.extract_strided_slice %1 {offsets = [33, 0], sizes = [224, 8], strides = [1, 1]} : vector<264x8xbf16> to vector<224x8xbf16>
    %c7 = arith.constant 7 : index
    %c0_24 = arith.constant 0 : index
    %c0_25 = arith.constant 0 : index
    %39 = vector.load %arg3[%c7, %c0_24, %c0_25] : memref<9x8x8xbf16, #tpu.memory_space<vmem>>, vector<1x8x8xbf16>
    %40 = vector.shape_cast %39 : vector<1x8x8xbf16> to vector<8x8xbf16>
    %cst_26 = arith.constant dense<0.000000e+00> : vector<224x8xf32>
    %41 = tpu.matmul %38, %40, %cst_26 {dimension_numbers = #tpu.dot_dimension_numbers<[1], [0], [0], [1], [0, 0, 1, 1], [], []>} : vector<224x8xbf16>, vector<8x8xbf16>, vector<224x8xf32> -> vector<224x8xf32>
    %42 = arith.addf %37, %41 : vector<224x8xf32>
    %43 = vector.extract_strided_slice %1 {offsets = [34, 0], sizes = [224, 8], strides = [1, 1]} : vector<264x8xbf16> to vector<224x8xbf16>
    %c8 = arith.constant 8 : index
    %c0_27 = arith.constant 0 : index
    %c0_28 = arith.constant 0 : index
    %44 = vector.load %arg3[%c8, %c0_27, %c0_28] : memref<9x8x8xbf16, #tpu.memory_space<vmem>>, vector<1x8x8xbf16>
    %45 = vector.shape_cast %44 : vector<1x8x8xbf16> to vector<8x8xbf16>
    %cst_29 = arith.constant dense<0.000000e+00> : vector<224x8xf32>
    %46 = tpu.matmul %43, %45, %cst_29 {dimension_numbers = #tpu.dot_dimension_numbers<[1], [0], [0], [1], [0, 0, 1, 1], [], []>} : vector<224x8xbf16>, vector<8x8xbf16>, vector<224x8xf32> -> vector<224x8xf32>
    %47 = arith.addf %42, %46 : vector<224x8xf32>
    %c0_30 = arith.constant 0 : index
    %c0_31 = arith.constant 0 : index
    %48 = vector.load %arg4[%c0_30, %c0_31] : memref<1x8xf32, #tpu.memory_space<vmem>>, vector<1x8xf32>
    %49 = vector.broadcast %48 : vector<1x8xf32> to vector<224x8xf32>
    %50 = arith.addf %47, %49 : vector<224x8xf32>
    %c0_32 = arith.constant 0 : index
    %c0_33 = arith.constant 0 : index
    %c0_34 = arith.constant 0 : index
    %51 = vector.load %arg5[%c0_32, %c0_33, %c0_34] : memref<1x224x8xf32, #tpu.memory_space<vmem>>, vector<1x224x8xf32>
    %52 = vector.shape_cast %51 : vector<1x224x8xf32> to vector<224x8xf32>
    %53 = vector.shape_cast %50 : vector<224x8xf32> to vector<1x224x8xf32>
    tpu.vector_store %arg5[%c0_32, %c0_33, %c0_34], %53 {strides = array<i32>} : memref<1x224x8xf32, #tpu.memory_space<vmem>>, vector<1x224x8xf32>,
    return
  }
  func.func @transform_0(%arg0: i32, %arg1: i32) -> (i32, i32, i32) {
    %c0_i32 = arith.constant 0 : i32
    %c0_i32_0 = arith.constant 0 : i32
    %c0_i32_1 = arith.constant 0 : i32
    return %arg0, %c0_i32, %c0_i32_0 : i32, i32, i32
  }
  func.func @transform_1(%arg0: i32, %arg1: i32) -> (i32, i32, i32) {
    %c0_i32 = arith.constant 0 : i32
    %c0_i32_0 = arith.constant 0 : i32
    %c0_i32_1 = arith.constant 0 : i32
    %c0_i32_2 = arith.constant 0 : i32
    return %c0_i32, %c0_i32_0, %c0_i32_1 : i32, i32, i32
  }
  func.func @transform_2(%arg0: i32, %arg1: i32) -> (i32, i32) {
    %c0_i32 = arith.constant 0 : i32
    %c0_i32_0 = arith.constant 0 : i32
    %c0_i32_1 = arith.constant 0 : i32
    return %c0_i32, %c0_i32_0 : i32, i32
  }
  func.func @transform_3(%arg0: i32, %arg1: i32) -> (i32, i32, i32) {
    %c0_i32 = arith.constant 0 : i32
    %c0_i32_0 = arith.constant 0 : i32
    return %arg0, %arg1, %c0_i32 : i32, i32, i32
  }
}

</mosaic_0001>

<llo_original>
// kernel: complex_conv2d.1
$region0: #{complex_conv2d.1}
  #allocation0 [shape = 'u32[]', space=smem, size = 0x4, offset = 0x4, fixed_abs, tag = 'smem constant byte address 0x4 - core index']
  #allocation1 [shape = 'u32[144,128]{1,0:T(1,128)}', space=vmem, size = 0x12000, scoped, tag = 'internal scratch']
  %s0 = inlined_call_operand.vmem [shape: bf16[2,264,8], index: 0, kind: input, shape index: {}]
  %s1 = inlined_call_operand.vmem [shape: bf16[9,8,8], index: 1, kind: input, shape index: {}]
  %s2 = inlined_call_operand.vmem [shape: f32[1,8], index: 2, kind: input, shape index: {}]
  %s3 = inlined_call_operand.vmem [shape: f32[2,224,8], index: 3, kind: output, shape index: {}]
  %s4 = sld [smem:[#allocation0]]
  $region45: #{complex_conv2d.1} parent=0
    _
  %s6 = ssub.s32 1, %s4
  %s7 = scalar_select 0, %s6, %s4
  loop: start=0, step=1, limit=4
  $region2: #{complex_conv2d.1} parent=0 // loop_pre_header
    _
  $region3: #{complex_conv2d.1} parent=0 // loop_header
    %s9 = sphi 0, %s13
    %p10 = scmp.ge.s32.totalorder %s9, 4
    %s16 = sphi 0, %s28
    %s17 = sphi 0, %s24
    %s18 = sphi 0, %s16
    %s19 = sphi 0, %s17
    %s20 = sphi 0, %s18
    %s21 = sphi 0, %s19
    %s31 = sphi 0, %s33
    %s34 = sphi 0, %s31
    %s35 = sphi 0, %s34
    %s51 = sphi 0, %s35
    %s55 = sphi 0, %s55
    %s57 = sphi 0, %s55
    %s58 = sphi 0, %s57
    %s72 = sphi 0, %s58
    %s76 = sphi 0, %s76
    %s78 = sphi 0, %s76
    %s79 = sphi 0, %s78
    %s93 = sphi 0, %s79
    %s101 = sphi 0, %s103
    %s104 = sphi 0, %s101
    %s105 = sphi 0, %s104
    %s121 = sphi 0, %s105
  $region4: #{complex_conv2d.1} parent=0 // loop_header_branch
    %12 = sbr.rel (%p10) target = $region8
  $region5: #{complex_conv2d.1} parent=0 // loop_body
    %s14 = ssub.s32 %s9, 1
    %s15 = ssub.s32 %s9, 2
    %s22 = sadd.s32 1, %s17
    %p23 = scmp.ge.s32.totalorder %s22, 1
    %s24 = scalar_select %p23, 0, %s22
    %s25 = sadd.s32 1, %s16
    %s26 = scalar_select %p23, %s25, %s16
    %p27 = scmp.ge.s32.totalorder %s26, 2
    %s28 = scalar_select %p27, 0, %s26
    %s29 = ssub.s32 %s16, %s28
    %p30 = scmp.eq.s32.totalorder %s29, 0
    %s32 = sadd.s32 %s31, 1
    %s33 = scalar_select %p30, %s31, %s32
    %p36 = pneg %p30
    %p37 = scmp.eq.s32.totalorder %s9, 1
    %p38 = por %p36, %p37
    %p39 = scmp.ne.s32.totalorder %s31, %s34
    %p40 = scmp.eq.s32.totalorder %s9, 0
    %p41 = por %p39, %p40
    %p42 = scmp.ne.s32.totalorder %s31, %s34
    %p43 = scmp.eq.s32.totalorder %s14, 1
    %p44 = por %p42, %p43
    %p45 = scmp.ne.s32.totalorder %s34, %s35
    %p46 = scmp.eq.s32.totalorder %s14, 0
    %p47 = por %p45, %p46
    %p48 = scmp.ne.s32.totalorder %s34, %s35
    %p49 = scmp.eq.s32.totalorder %s15, 1
    %p50 = por %p48, %p49
    %p52 = scmp.ne.s32.totalorder %s35, %s51
    %p53 = scmp.eq.s32.totalorder %s15, 0
    %p54 = por %p52, %p53
    %s56 = sadd.s32 %s55, 1
    %p59 = scmp.eq.s32.totalorder %s9, 1
    %p60 = scmp.ne.s32.totalorder %s55, %s57
    %p61 = scmp.eq.s32.totalorder %s9, 0
    %p62 = por %p60, %p61
    %p63 = scmp.ne.s32.totalorder %s55, %s57
    %p64 = scmp.eq.s32.totalorder %s14, 1
    %p65 = por %p63, %p64
    %p66 = scmp.ne.s32.totalorder %s57, %s58
    %p67 = scmp.eq.s32.totalorder %s14, 0
    %p68 = por %p66, %p67
    %p69 = scmp.ne.s32.totalorder %s57, %s58
    %p70 = scmp.eq.s32.totalorder %s15, 1
    %p71 = por %p69, %p70
    %p73 = scmp.ne.s32.totalorder %s58, %s72
    %p74 = scmp.eq.s32.totalorder %s15, 0
    %p75 = por %p73, %p74
    %s77 = sadd.s32 %s76, 1
    %p80 = scmp.eq.s32.totalorder %s9, 1
    %p81 = scmp.ne.s32.totalorder %s76, %s78
    %p82 = scmp.eq.s32.totalorder %s9, 0
    %p83 = por %p81, %p82
    %p84 = scmp.ne.s32.totalorder %s76, %s78
    %p85 = scmp.eq.s32.totalorder %s14, 1
    %p86 = por %p84, %p85
    %p87 = scmp.ne.s32.totalorder %s78, %s79
    %p88 = scmp.eq.s32.totalorder %s14, 0
    %p89 = por %p87, %p88
    %p90 = scmp.ne.s32.totalorder %s78, %s79
    %p91 = scmp.eq.s32.totalorder %s15, 1
    %p92 = por %p90, %p91
    %p94 = scmp.ne.s32.totalorder %s79, %s93
    %p95 = scmp.eq.s32.totalorder %s15, 0
    %p96 = por %p94, %p95
    %s97 = ssub.s32 %s16, %s28
    %s98 = ssub.s32 %s17, %s24
    %s99 = sor.u32 %s97, %s98
    %p100 = scmp.eq.s32.totalorder %s99, 0
    %s102 = sadd.s32 %s101, 1
    %s103 = scalar_select %p100, %s101, %s102
    %p106 = pneg %p100
    %p107 = scmp.eq.s32.totalorder %s9, 1
    %p108 = por %p106, %p107
    %p109 = scmp.ne.s32.totalorder %s101, %s104
    %p110 = scmp.eq.s32.totalorder %s9, 0
    %p111 = por %p109, %p110
    %p112 = scmp.ne.s32.totalorder %s101, %s104
    %p113 = scmp.eq.s32.totalorder %s14, 1
    %p114 = por %p112, %p113
    %p115 = scmp.ne.s32.totalorder %s104, %s105
    %p116 = scmp.eq.s32.totalorder %s14, 0
    %p117 = por %p115, %p116
    %p118 = scmp.ne.s32.totalorder %s104, %s105
    %p119 = scmp.eq.s32.totalorder %s15, 1
    %p120 = por %p118, %p119
    %p122 = scmp.ne.s32.totalorder %s105, %s121
    %p123 = scmp.eq.s32.totalorder %s15, 0
    %p124 = por %p122, %p123
    %p125 = scmp.le.s32.totalorder 1, %s9
    %p126 = scmp.lt.s32.totalorder %s9, 3
    %p127 = pnand %p125, %p126
    %p128 = pneg %p127
    // Predicated region
    $region9: #{complex_conv2d.1} parent=5 // pred_check
      _
    $region10: #{complex_conv2d.1} parent=5 // pred_check_branch
      %130 = sbr.rel (%p127) target = $region12
    $region11: #{complex_conv2d.1} parent=5 // pred_region
      %s131 = ssub.s32 %s9, 1
      // Predicated region
      $region13: #{complex_conv2d.1} parent=11 // pred_check
        %p132 = pneg %p68
      $region14: #{complex_conv2d.1} parent=11 // pred_check_branch
        %134 = sbr.rel (%p132) target = $region16
      $region15: #{complex_conv2d.1} parent=11 // pred_region
        _
      $region16: #{complex_conv2d.1} parent=11 // pred_fallthru
        _
      // Predicated region
      $region17: #{complex_conv2d.1} parent=11 // pred_check
        %p135 = pneg %p89
      $region18: #{complex_conv2d.1} parent=11 // pred_check_branch
        %137 = sbr.rel (%p135) target = $region20
      $region19: #{complex_conv2d.1} parent=11 // pred_region
        _
      $region20: #{complex_conv2d.1} parent=11 // pred_fallthru
        _
    $region12: #{complex_conv2d.1} parent=5 // pred_fallthru
      _
    %p138 = scmp.lt.s32.totalorder %s9, 2
    // Predicated region
    $region21: #{complex_conv2d.1} parent=5 // pred_check
      %p139 = pneg %p138
    $region22: #{complex_conv2d.1} parent=5 // pred_check_branch
      %141 = sbr.rel (%p139) target = $region24
    $region23: #{complex_conv2d.1} parent=5 // pred_region
      // Predicated region
      $region25: #{complex_conv2d.1} parent=23 // pred_check
        %p142 = pneg %p41
      $region26: #{complex_conv2d.1} parent=23 // pred_check_branch
        %144 = sbr.rel (%p142) target = $region28
      $region27: #{complex_conv2d.1} parent=23 // pred_region
        %p145 = scmp.lt.s32.totalorder %s16, 1
        %s146 = scalar_select %p145, %s16, 1
        %s147 = smul.addr %s146, 33
        %s148 = smul.addr %s147, 4
        %s149 = scalar_lea.vmem %s0, %s148
      $region28: #{complex_conv2d.1} parent=23 // pred_fallthru
        _
    $region24: #{complex_conv2d.1} parent=5 // pred_fallthru
      _
    %p150 = scmp.le.s32.totalorder 1, %s9
    %p151 = scmp.lt.s32.totalorder %s9, 3
    %p152 = pnand %p150, %p151
    %p153 = pneg %p152
    // Predicated region
    $region29: #{complex_conv2d.1} parent=5 // pred_check
      _
    $region30: #{complex_conv2d.1} parent=5 // pred_check_branch
      %155 = sbr.rel (%p152) target = $region32
    $region31: #{complex_conv2d.1} parent=5 // pred_region
      %s156 = ssub.s32 %s9, 1
      %p157 = scmp.lt.s32.totalorder %s18, 1
      %s158 = scalar_select %p157, %s18, 1
      %s159 = smul.addr %s158, 33
      %s160 = smul.addr %s159, 4
      %s161 = scalar_lea.vmem %s0, %s160
      %p162 = pneg %p47
      %p163 = pneg %p44
      %p164 = pneg %p68
      %p165 = pneg %p65
      %p166 = pneg %p89
      %p167 = pneg %p86
      %p168 = pneg %p117
      %p169 = pneg %p114
      %s170 = smul.u32 28, %s19
      %p171 = scmp.lt.s32.totalorder %s18, 1
      %s172 = scalar_select %p171, %s18, 1
      %p173 = scmp.lt.s32.totalorder %s170, 27
      %s174 = scalar_select %p173, %s170, 27
      %s175 = smul.addr %s172, 28
      %s176 = sadd.s32 %s174, %s175
      %s177 = smul.addr %s176, 8
      %s178 = scalar_lea.vmem %s3, %s177
      %p179 = scmp.lt.s32.totalorder %s18, 1
      %s180 = scalar_select %p179, %s18, 1
      %s181 = smul.addr %s180, 33
      %s182 = smul.addr %s181, 4
      %s183 = scalar_lea.vmem %s0, %s182
      %s184 = smul.u32 28, %s19
      %p185 = scmp.lt.s32.totalorder %s18, 1
      %s186 = scalar_select %p185, %s18, 1
      %p187 = scmp.lt.s32.totalorder %s184, 27
      %s188 = scalar_select %p187, %s184, 27
      %s189 = smul.addr %s186, 28
      %s190 = sadd.s32 %s188, %s189
      %s191 = smul.addr %s190, 8
      %s192 = scalar_lea.vmem %s3, %s191
      %s193 = smul.u32 28, %s19
      %v195 = vld [vmem:[%s183] sm:$0xf]
      %v196 = vld [vmem:[%s183 + $0x4] sm:$0xf]
      %v197 = vld [vmem:[%s183 + $0x8] sm:$0xf]
      %v198 = vld [vmem:[%s183 + $0xc] sm:$0xf]
      %v199 = vld [vmem:[%s183 + $0x10] sm:$0xf]
      %v200 = vld [vmem:[%s183 + $0x14] sm:$0xf]
      %v201 = vld [vmem:[%s183 + $0x18] sm:$0xf]
      %v202 = vld [vmem:[%s183 + $0x1c] sm:$0xf]
      %v203 = vld [vmem:[%s183 + $0x20] sm:$0xf]
      %v204 = vld [vmem:[%s183 + $0x24] sm:$0xf]
      %v205 = vld [vmem:[%s183 + $0x28] sm:$0xf]
      %v206 = vld [vmem:[%s183 + $0x2c] sm:$0xf]
      %v207 = vld [vmem:[%s183 + $0x30] sm:$0xf]
      %v208 = vld [vmem:[%s183 + $0x34] sm:$0xf]
      %v209 = vld [vmem:[%s183 + $0x38] sm:$0xf]
      %v210 = vld [vmem:[%s183 + $0x3c] sm:$0xf]
      %v211 = vld [vmem:[%s183 + $0x40] sm:$0xf]
      %v212 = vld [vmem:[%s183 + $0x44] sm:$0xf]
      %v213 = vld [vmem:[%s183 + $0x48] sm:$0xf]
      %v214 = vld [vmem:[%s183 + $0x4c] sm:$0xf]
      %v215 = vld [vmem:[%s183 + $0x50] sm:$0xf]
      %v216 = vld [vmem:[%s183 + $0x54] sm:$0xf]
      %v217 = vld [vmem:[%s183 + $0x58] sm:$0xf]
      %v218 = vld [vmem:[%s183 + $0x5c] sm:$0xf]
      %v219 = vld [vmem:[%s183 + $0x60] sm:$0xf]
      %v220 = vld [vmem:[%s183 + $0x64] sm:$0xf]
      %v221 = vld [vmem:[%s183 + $0x68] sm:$0xf]
      %v222 = vld [vmem:[%s183 + $0x6c] sm:$0xf]
      %v223 = vld [vmem:[%s183 + $0x70] sm:$0xf]
      %v224 = vld [vmem:[%s183 + $0x74] sm:$0xf]
      %v225 = vld [vmem:[%s183 + $0x78] sm:$0xf]
      %v226 = vld [vmem:[%s183 + $0x7c] sm:$0xf]
      %v227 = vld [vmem:[%s183 + $0x80] sm:$0xf]
      %v228 = vld [vmem:[%s1] sm:$0xf]
      %s229 = scalar_lea.vmem %s1, 4
      %v230 = vld [vmem:[%s229] sm:$0xf]
      %v260 = vunpack.c.l.b16 %v195
      %v261 = vunpack.c.l.b16 %v196
      %v262 = vunpack.c.l.b16 %v197
      %v263 = vunpack.c.l.b16 %v198
      %v264 = vunpack.c.l.b16 %v199
      %v265 = vunpack.c.l.b16 %v200
      %v266 = vunpack.c.l.b16 %v201
      %v267 = vunpack.c.l.b16 %v202
      %v268 = vunpack.c.l.b16 %v203
      %v269 = vunpack.c.l.b16 %v204
      %v270 = vunpack.c.l.b16 %v205
      %v271 = vunpack.c.l.b16 %v206
      %v272 = vunpack.c.l.b16 %v207
      %v273 = vunpack.c.l.b16 %v208
      %v274 = vunpack.c.l.b16 %v209
      %v275 = vunpack.c.l.b16 %v210
      %v276 = vunpack.c.l.b16 %v211
      %v277 = vunpack.c.l.b16 %v212
      %v278 = vunpack.c.l.b16 %v213
      %v279 = vunpack.c.l.b16 %v214
      %v280 = vunpack.c.l.b16 %v215
      %v281 = vunpack.c.l.b16 %v216
      %v282 = vunpack.c.l.b16 %v217
      %v283 = vunpack.c.l.b16 %v218
      %v284 = vunpack.c.l.b16 %v219
      %v285 = vunpack.c.l.b16 %v220
      %v286 = vunpack.c.l.b16 %v221
      %v287 = vunpack.c.l.b16 %v222
      %v288 = vunpack.c.l.b16 %v223
      %v289 = vpack.c.b16 %v261, %v260
      %v290 = vpack.c.b16 %v263, %v262
      %v291 = vpack.c.b16 %v265, %v264
      %v292 = vpack.c.b16 %v267, %v266
      %v293 = vpack.c.b16 %v269, %v268
      %v294 = vpack.c.b16 %v271, %v270
      %v295 = vpack.c.b16 %v273, %v272
      %v296 = vpack.c.b16 %v275, %v274
      %v297 = vpack.c.b16 %v277, %v276
      %v298 = vpack.c.b16 %v279, %v278
      %v299 = vpack.c.b16 %v281, %v280
      %v300 = vpack.c.b16 %v283, %v282
      %v301 = vpack.c.b16 %v285, %v284
      %v302 = vpack.c.b16 %v287, %v286
      %v303 = vpack.c.b16 %v288, %v288
      %vm304 = vsmask.f32 7424
      %v306 = vshrl.u32 %v289, 16
      %v308 = vshll.u32 %v289, 16
      %v310 = vrot.slane %v308, 1
      %v311 = vor.u32 %v306, %v310
      %v313 = vshll.u32 %v290, 16
      %v315 = vrot.slane %v313, 1
      %v316 = vsel %vm304, %v311, %v315
      %v317 = vshrl.u32 %v290, 16
      %v319 = vor.u32 %v317, %v315
      %v321 = vshll.u32 %v291, 16
      %v323 = vrot.slane %v321, 1
      %v324 = vsel %vm304, %v319, %v323
      %v325 = vshrl.u32 %v291, 16
      %v327 = vor.u32 %v325, %v323
      %v329 = vshll.u32 %v292, 16
      %v331 = vrot.slane %v329, 1
      %v332 = vsel %vm304, %v327, %v331
      %v333 = vshrl.u32 %v292, 16
      %v335 = vor.u32 %v333, %v331
      %v337 = vshll.u32 %v293, 16
      %v339 = vrot.slane %v337, 1
      %v340 = vsel %vm304, %v335, %v339
      %v341 = vshrl.u32 %v293, 16
      %v343 = vor.u32 %v341, %v339
      %v345 = vshll.u32 %v294, 16
      %v347 = vrot.slane %v345, 1
      %v348 = vsel %vm304, %v343, %v347
      %v349 = vshrl.u32 %v294, 16
      %v351 = vor.u32 %v349, %v347
      %v353 = vshll.u32 %v295, 16
      %v355 = vrot.slane %v353, 1
      %v356 = vsel %vm304, %v351, %v355
      %v357 = vshrl.u32 %v295, 16
      %v359 = vor.u32 %v357, %v355
      %v361 = vshll.u32 %v296, 16
      %v363 = vrot.slane %v361, 1
      %v364 = vsel %vm304, %v359, %v363
      %v365 = vshrl.u32 %v296, 16
      %v367 = vor.u32 %v365, %v363
      %v369 = vshll.u32 %v297, 16
      %v371 = vrot.slane %v369, 1
      %v372 = vsel %vm304, %v367, %v371
      %v373 = vshrl.u32 %v297, 16
      %v375 = vor.u32 %v373, %v371
      %v377 = vshll.u32 %v298, 16
      %v379 = vrot.slane %v377, 1
      %v380 = vsel %vm304, %v375, %v379
      %v381 = vshrl.u32 %v298, 16
      %v383 = vor.u32 %v381, %v379
      %v385 = vshll.u32 %v299, 16
      %v387 = vrot.slane %v385, 1
      %v388 = vsel %vm304, %v383, %v387
      %v389 = vshrl.u32 %v299, 16
      %v391 = vor.u32 %v389, %v387
      %v393 = vshll.u32 %v300, 16
      %v395 = vrot.slane %v393, 1
      %v396 = vsel %vm304, %v391, %v395
      %v397 = vshrl.u32 %v300, 16
      %v399 = vor.u32 %v397, %v395
      %v401 = vshll.u32 %v301, 16
      %v403 = vrot.slane %v401, 1
      %v404 = vsel %vm304, %v399, %v403
      %v405 = vshrl.u32 %v301, 16
      %v407 = vor.u32 %v405, %v403
      %v409 = vshll.u32 %v302, 16
      %v411 = vrot.slane %v409, 1
      %v412 = vsel %vm304, %v407, %v411
      %v413 = vshrl.u32 %v302, 16
      %v415 = vor.u32 %v413, %v411
      %v417 = vshll.u32 %v303, 16
      %v419 = vrot.slane %v417, 1
      %v420 = vsel %vm304, %v415, %v419
      %vm421 = vcmask 64512
      %v423 = vsel %vm421, %v316, 0
      %v426 = vsel %vm421, %v324, 0
      %v429 = vsel %vm421, %v332, 0
      %v432 = vsel %vm421, %v340, 0
      %v435 = vsel %vm421, %v348, 0
      %v438 = vsel %vm421, %v356, 0
      %v441 = vsel %vm421, %v364, 0
      %v444 = vsel %vm421, %v372, 0
      %v447 = vsel %vm421, %v380, 0
      %v450 = vsel %vm421, %v388, 0
      %v453 = vsel %vm421, %v396, 0
      %v456 = vsel %vm421, %v404, 0
      %v459 = vsel %vm421, %v412, 0
      %v462 = vsel %vm421, %v420, 0
      %vm464 = vcmask 1043456
      %v466 = vsel %vm464, %v230, 0
      %468 = vmatprep.subr.bf16.mxu0 0
      %469 = vmatpush1.bf16.msra.mxu0 %v466
      %470 = vmatprep.subr.bf16.mxu0 0
      %471 = vmatpush1.bf16.msra.mxu0 0
      %472 = vmatprep.subr.bf16.mxu0 0
      %473 = vmatpush1.bf16.msra.mxu0 0
      %474 = vmatprep.subr.bf16.mxu0 0
      %475 = vmatpush1.bf16.msra.mxu0 0
      %476 = vmatprep.subr.bf16.mxu0 0
      %477 = vmatpush1.bf16.msra.mxu0 0
      %478 = vmatprep.subr.bf16.mxu0 0
      %479 = vmatpush1.bf16.msra.mxu0 0
      %480 = vmatprep.subr.bf16.mxu0 0
      %481 = vmatpush1.bf16.msra.mxu0 0
      %482 = vmatprep.subr.bf16.mxu0 0
      %483 = vmatpush1.bf16.msra.mxu0 0
      %484 = vmatprep.subr.bf16.mxu0 0
      %485 = vmatpush1.bf16.msra.mxu0 0
      %486 = vmatprep.subr.bf16.mxu0 0
      %487 = vmatpush1.bf16.msra.mxu0 0
      %488 = vmatprep.subr.bf16.mxu0 0
      %489 = vmatpush1.bf16.msra.mxu0 0
      %490 = vmatprep.subr.bf16.mxu0 0
      %491 = vmatpush1.bf16.msra.mxu0 0
      %492 = vmatprep.subr.bf16.mxu0 0
      %493 = vmatpush1.bf16.msra.mxu0 0
      %494 = vmatprep.subr.bf16.mxu0 0
      %495 = vmatpush1.bf16.msra.mxu0 0
      %496 = vmatprep.subr.bf16.mxu0 0
      %497 = vmatpush1.bf16.msra.mxu0 0
      %498 = vmatprep.subr.bf16.mxu0 0
      %499 = vmatpush1.bf16.msra.mxu0 0
      %500 = vmatprep.mubr.bf16.mxu0 0
      %501 = vmatmul.mubr.bf16.gmra.mrb[0].mxu0 %v423
      %v502 = vpop.f32.mrb[0].mxu0
      %v503 = vadd.f32 0.0, %v502
      %v504 = vpop.f32.mrb[0].mxu0
      %v505 = vpop.f32.mrb[0].mxu0
      %v506 = vadd.f32 0.0, %v505
      %v507 = vpop.f32.mrb[0].mxu0
      %508 = vmatprep.mubr.bf16.mxu0 0
      %509 = vmatmul.mubr.bf16.gmra.mrb[0].mxu0 %v426
      %v510 = vpop.f32.mrb[0].mxu0
      %v511 = vadd.f32 0.0, %v510
      %v512 = vpop.f32.mrb[0].mxu0
      %v513 = vpop.f32.mrb[0].mxu0
      %v514 = vadd.f32 0.0, %v513
      %v515 = vpop.f32.mrb[0].mxu0
      %516 = vmatprep.mubr.bf16.mxu0 0
      %517 = vmatmul.mubr.bf16.gmra.mrb[0].mxu0 %v429
      %v518 = vpop.f32.mrb[0].mxu0
      %v519 = vadd.f32 0.0, %v518
      %v520 = vpop.f32.mrb[0].mxu0
      %v521 = vpop.f32.mrb[0].mxu0
      %v522 = vadd.f32 0.0, %v521
      %v523 = vpop.f32.mrb[0].mxu0
      %524 = vmatprep.mubr.bf16.mxu0 0
      %525 = vmatmul.mubr.bf16.gmra.mrb[0].mxu0 %v432
      %v526 = vpop.f32.mrb[0].mxu0
      %v527 = vadd.f32 0.0, %v526
      %v528 = vpop.f32.mrb[0].mxu0
      %v529 = vpop.f32.mrb[0].mxu0
      %v530 = vadd.f32 0.0, %v529
      %v531 = vpop.f32.mrb[0].mxu0
      %532 = vmatprep.mubr.bf16.mxu0 0
      %533 = vmatmul.mubr.bf16.gmra.mrb[0].mxu0 %v435
      %v534 = vpop.f32.mrb[0].mxu0
      %v535 = vadd.f32 0.0, %v534
      %v536 = vpop.f32.mrb[0].mxu0
      %v537 = vpop.f32.mrb[0].mxu0
      %v538 = vadd.f32 0.0, %v537
      %v539 = vpop.f32.mrb[0].mxu0
      %540 = vmatprep.mubr.bf16.mxu0 0
      %541 = vmatmul.mubr.bf16.gmra.mrb[0].mxu0 %v438
      %v542 = vpop.f32.mrb[0].mxu0
      %v543 = vadd.f32 0.0, %v542
      %v544 = vpop.f32.mrb[0].mxu0
      %v545 = vpop.f32.mrb[0].mxu0
      %v546 = vadd.f32 0.0, %v545
      %v547 = vpop.f32.mrb[0].mxu0
      %548 = vmatprep.mubr.bf16.mxu0 0
      %549 = vmatmul.mubr.bf16.gmra.mrb[0].mxu0 %v441
      %v550 = vpop.f32.mrb[0].mxu0
      %v551 = vadd.f32 0.0, %v550
      %v552 = vpop.f32.mrb[0].mxu0
      %v553 = vpop.f32.mrb[0].mxu0
      %v554 = vadd.f32 0.0, %v553
      %v555 = vpop.f32.mrb[0].mxu0
      %556 = vmatprep.mubr.bf16.mxu0 0
      %557 = vmatmul.mubr.bf16.gmra.mrb[0].mxu0 %v444
      %v558 = vpop.f32.mrb[0].mxu0
      %v559 = vadd.f32 0.0, %v558
      %v560 = vpop.f32.mrb[0].mxu0
      %v561 = vpop.f32.mrb[0].mxu0
      %v562 = vadd.f32 0.0, %v561
      %v563 = vpop.f32.mrb[0].mxu0
      %564 = vmatprep.mubr.bf16.mxu0 0
      %565 = vmatmul.mubr.bf16.gmra.mrb[0].mxu0 %v447
      %v566 = vpop.f32.mrb[0].mxu0
      %v567 = vadd.f32 0.0, %v566
      %v568 = vpop.f32.mrb[0].mxu0
      %v569 = vpop.f32.mrb[0].mxu0
      %v570 = vadd.f32 0.0, %v569
      %v571 = vpop.f32.mrb[0].mxu0
      %572 = vmatprep.mubr.bf16.mxu0 0
      %573 = vmatmul.mubr.bf16.gmra.mrb[0].mxu0 %v450
      %v574 = vpop.f32.mrb[0].mxu0
      %v575 = vadd.f32 0.0, %v574
      %v576 = vpop.f32.mrb[0].mxu0
      %v577 = vpop.f32.mrb[0].mxu0
      %v578 = vadd.f32 0.0, %v577
      %v579 = vpop.f32.mrb[0].mxu0
      %580 = vmatprep.mubr.bf16.mxu0 0
      %581 = vmatmul.mubr.bf16.gmra.mrb[0].mxu0 %v453
      %v582 = vpop.f32.mrb[0].mxu0
      %v583 = vadd.f32 0.0, %v582
      %v584 = vpop.f32.mrb[0].mxu0
      %v585 = vpop.f32.mrb[0].mxu0
      %v586 = vadd.f32 0.0, %v585
      %v587 = vpop.f32.mrb[0].mxu0
      %588 = vmatprep.mubr.bf16.mxu0 0
      %589 = vmatmul.mubr.bf16.gmra.mrb[0].mxu0 %v456
      %v590 = vpop.f32.mrb[0].mxu0
      %v591 = vadd.f32 0.0, %v590
      %v592 = vpop.f32.mrb[0].mxu0
      %v593 = vpop.f32.mrb[0].mxu0
      %v594 = vadd.f32 0.0, %v593
      %v595 = vpop.f32.mrb[0].mxu0
      %596 = vmatprep.mubr.bf16.mxu0 0
      %597 = vmatmul.mubr.bf16.gmra.mrb[0].mxu0 %v459
      %v598 = vpop.f32.mrb[0].mxu0
      %v599 = vadd.f32 0.0, %v598
      %v600 = vpop.f32.mrb[0].mxu0
      %v601 = vpop.f32.mrb[0].mxu0
      %v602 = vadd.f32 0.0, %v601
      %v603 = vpop.f32.mrb[0].mxu0
      %604 = vmatprep.mubr.bf16.mxu0 0
      %605 = vmatmul.mubr.bf16.gmra.mrb[0].mxu0 %v462
      %v606 = vpop.f32.mrb[0].mxu0
      %v607 = vadd.f32 0.0, %v606
      %v608 = vpop.f32.mrb[0].mxu0
      %v609 = vpop.f32.mrb[0].mxu0
      %v610 = vadd.f32 0.0, %v609
      %v611 = vpop.f32.mrb[0].mxu0
      %612 = vdwg.mxu0
      %v613 = vsel %vm421, %v289, 0
      %v615 = vsel %vm421, %v290, 0
      %v617 = vsel %vm421, %v291, 0
      %v619 = vsel %vm421, %v292, 0
      %v621 = vsel %vm421, %v293, 0
      %v623 = vsel %vm421, %v294, 0
      %v625 = vsel %vm421, %v295, 0
      %v627 = vsel %vm421, %v296, 0
      %v629 = vsel %vm421, %v297, 0
      %v631 = vsel %vm421, %v298, 0
      %v633 = vsel %vm421, %v299, 0
      %v635 = vsel %vm421, %v300, 0
      %v637 = vsel %vm421, %v301, 0
      %v639 = vsel %vm421, %v302, 0
      %v642 = vsel %vm464, %v228, 0
      %644 = vmatprep.subr.bf16.mxu0 0
      %645 = vmatpush1.bf16.msra.mxu0 %v642
      %646 = vmatprep.subr.bf16.mxu0 0
      %647 = vmatpush1.bf16.msra.mxu0 0
      %648 = vmatprep.subr.bf16.mxu0 0
      %649 = vmatpush1.bf16.msra.mxu0 0
      %650 = vmatprep.subr.bf16.mxu0 0
      %651 = vmatpush1.bf16.msra.mxu0 0
      %652 = vmatprep.subr.bf16.mxu0 0
      %653 = vmatpush1.bf16.msra.mxu0 0
      %654 = vmatprep.subr.bf16.mxu0 0
      %655 = vmatpush1.bf16.msra.mxu0 0
      %656 = vmatprep.subr.bf16.mxu0 0
      %657 = vmatpush1.bf16.msra.mxu0 0
      %658 = vmatprep.subr.bf16.mxu0 0
      %659 = vmatpush1.bf16.msra.mxu0 0
      %660 = vmatprep.subr.bf16.mxu0 0
      %661 = vmatpush1.bf16.msra.mxu0 0
      %662 = vmatprep.subr.bf16.mxu0 0
      %663 = vmatpush1.bf16.msra.mxu0 0
      %664 = vmatprep.subr.bf16.mxu0 0
      %665 = vmatpush1.bf16.msra.mxu0 0
      %666 = vmatprep.subr.bf16.mxu0 0
      %667 = vmatpush1.bf16.msra.mxu0 0
      %668 = vmatprep.subr.bf16.mxu0 0
      %669 = vmatpush1.bf16.msra.mxu0 0
      %670 = vmatprep.subr.bf16.mxu0 0
      %671 = vmatpush1.bf16.msra.mxu0 0
      %672 = vmatprep.subr.bf16.mxu0 0
      %673 = vmatpush1.bf16.msra.mxu0 0
      %674 = vmatprep.subr.bf16.mxu0 0
      %675 = vmatpush1.bf16.msra.mxu0 0
      %676 = vmatprep.mubr.bf16.mxu0 0
      %677 = vmatmul.mubr.bf16.gmra.mrb[0].mxu0 %v613
      %v678 = vpop.f32.mrb[0].mxu0
      %v679 = vadd.f32 %v503, %v678
      %v680 = vpop.f32.mrb[0].mxu0
      %v681 = vpop.f32.mrb[0].mxu0
      %v682 = vadd.f32 %v506, %v681
      %v683 = vpop.f32.mrb[0].mxu0
      %684 = vmatprep.mubr.bf16.mxu0 0
      %685 = vmatmul.mubr.bf16.gmra.mrb[0].mxu0 %v615
      %v686 = vpop.f32.mrb[0].mxu0
      %v687 = vadd.f32 %v511, %v686
      %v688 = vpop.f32.mrb[0].mxu0
      %v689 = vpop.f32.mrb[0].mxu0
      %v690 = vadd.f32 %v514, %v689
      %v691 = vpop.f32.mrb[0].mxu0
      %692 = vmatprep.mubr.bf16.mxu0 0
      %693 = vmatmul.mubr.bf16.gmra.mrb[0].mxu0 %v617
      %v694 = vpop.f32.mrb[0].mxu0
      %v695 = vadd.f32 %v519, %v694
      %v696 = vpop.f32.mrb[0].mxu0
      %v697 = vpop.f32.mrb[0].mxu0
      %v698 = vadd.f32 %v522, %v697
      %v699 = vpop.f32.mrb[0].mxu0
      %700 = vmatprep.mubr.bf16.mxu0 0
      %701 = vmatmul.mubr.bf16.gmra.mrb[0].mxu0 %v619
      %v702 = vpop.f32.mrb[0].mxu0
      %v703 = vadd.f32 %v527, %v702
      %v704 = vpop.f32.mrb[0].mxu0
      %v705 = vpop.f32.mrb[0].mxu0
      %v706 = vadd.f32 %v530, %v705
      %v707 = vpop.f32.mrb[0].mxu0
      %708 = vmatprep.mubr.bf16.mxu0 0
      %709 = vmatmul.mubr.bf16.gmra.mrb[0].mxu0 %v621
      %v710 = vpop.f32.mrb[0].mxu0
      %v711 = vadd.f32 %v535, %v710
      %v712 = vpop.f32.mrb[0].mxu0
      %v713 = vpop.f32.mrb[0].mxu0
      %v714 = vadd.f32 %v538, %v713
      %v715 = vpop.f32.mrb[0].mxu0
      %716 = vmatprep.mubr.bf16.mxu0 0
      %717 = vmatmul.mubr.bf16.gmra.mrb[0].mxu0 %v623
      %v718 = vpop.f32.mrb[0].mxu0
      %v719 = vadd.f32 %v543, %v718
      %v720 = vpop.f32.mrb[0].mxu0
      %v721 = vpop.f32.mrb[0].mxu0
      %v722 = vadd.f32 %v546, %v721
      %v723 = vpop.f32.mrb[0].mxu0
      %724 = vmatprep.mubr.bf16.mxu0 0
      %725 = vmatmul.mubr.bf16.gmra.mrb[0].mxu0 %v625
      %v726 = vpop.f32.mrb[0].mxu0
      %v727 = vadd.f32 %v551, %v726
      %v728 = vpop.f32.mrb[0].mxu0
      %v729 = vpop.f32.mrb[0].mxu0
      %v730 = vadd.f32 %v554, %v729
      %v731 = vpop.f32.mrb[0].mxu0
      %732 = vmatprep.mubr.bf16.mxu0 0
      %733 = vmatmul.mubr.bf16.gmra.mrb[0].mxu0 %v627
      %v734 = vpop.f32.mrb[0].mxu0
      %v735 = vadd.f32 %v559, %v734
      %v736 = vpop.f32.mrb[0].mxu0
      %v737 = vpop.f32.mrb[0].mxu0
      %v738 = vadd.f32 %v562, %v737
      %v739 = vpop.f32.mrb[0].mxu0
      %740 = vmatprep.mubr.bf16.mxu0 0
      %741 = vmatmul.mubr.bf16.gmra.mrb[0].mxu0 %v629
      %v742 = vpop.f32.mrb[0].mxu0
      %v743 = vadd.f32 %v567, %v742
      %v744 = vpop.f32.mrb[0].mxu0
      %v745 = vpop.f32.mrb[0].mxu0
      %v746 = vadd.f32 %v570, %v745
      %v747 = vpop.f32.mrb[0].mxu0
      %748 = vmatprep.mubr.bf16.mxu0 0
      %749 = vmatmul.mubr.bf16.gmra.mrb[0].mxu0 %v631
      %v750 = vpop.f32.mrb[0].mxu0
      %v751 = vadd.f32 %v575, %v750
      %v752 = vpop.f32.mrb[0].mxu0
      %v753 = vpop.f32.mrb[0].mxu0
      %v754 = vadd.f32 %v578, %v753
      %v755 = vpop.f32.mrb[0].mxu0
      %756 = vmatprep.mubr.bf16.mxu0 0
      %757 = vmatmul.mubr.bf16.gmra.mrb[0].mxu0 %v633
      %v758 = vpop.f32.mrb[0].mxu0
      %v759 = vadd.f32 %v583, %v758
      %v760 = vpop.f32.mrb[0].mxu0
      %v761 = vpop.f32.mrb[0].mxu0
      %v762 = vadd.f32 %v586, %v761
      %v763 = vpop.f32.mrb[0].mxu0
      %764 = vmatprep.mubr.bf16.mxu0 0
      %765 = vmatmul.mubr.bf16.gmra.mrb[0].mxu0 %v635
      %v766 = vpop.f32.mrb[0].mxu0
      %v767 = vadd.f32 %v591, %v766
      %v768 = vpop.f32.mrb[0].mxu0
      %v769 = vpop.f32.mrb[0].mxu0
      %v770 = vadd.f32 %v594, %v769
      %v771 = vpop.f32.mrb[0].mxu0
      %772 = vmatprep.mubr.bf16.mxu0 0
      %773 = vmatmul.mubr.bf16.gmra.mrb[0].mxu0 %v637
      %v774 = vpop.f32.mrb[0].mxu0
      %v775 = vadd.f32 %v599, %v774
      %v776 = vpop.f32.mrb[0].mxu0
      %v777 = vpop.f32.mrb[0].mxu0
      %v778 = vadd.f32 %v602, %v777
      %v779 = vpop.f32.mrb[0].mxu0
      %780 = vmatprep.mubr.bf16.mxu0 0
      %781 = vmatmul.mubr.bf16.gmra.mrb[0].mxu0 %v639
      %v782 = vpop.f32.mrb[0].mxu0
      %v783 = vadd.f32 %v607, %v782
      %v784 = vpop.f32.mrb[0].mxu0
      %v785 = vpop.f32.mrb[0].mxu0
      %v786 = vadd.f32 %v610, %v785
      %v787 = vpop.f32.mrb[0].mxu0
      %788 = vdwg.mxu0
      %s789 = scalar_lea.vmem %s1, 8
      %v790 = vld [vmem:[%s789] sm:$0xf]
      %vm791 = vcmask 1046528
      %v792 = vrot.slane %v289, 1
      %v793 = vrot.slane %v290, 1
      %v794 = vsel %vm791, %v792, %v793
      %v795 = vrot.slane %v291, 1
      %v796 = vsel %vm791, %v793, %v795
      %v797 = vrot.slane %v292, 1
      %v798 = vsel %vm791, %v795, %v797
      %v799 = vrot.slane %v293, 1
      %v800 = vsel %vm791, %v797, %v799
      %v801 = vrot.slane %v294, 1
      %v802 = vsel %vm791, %v799, %v801
      %v803 = vrot.slane %v295, 1
      %v804 = vsel %vm791, %v801, %v803
      %v805 = vrot.slane %v296, 1
      %v806 = vsel %vm791, %v803, %v805
      %v807 = vrot.slane %v297, 1
      %v808 = vsel %vm791, %v805, %v807
      %v809 = vrot.slane %v298, 1
      %v810 = vsel %vm791, %v807, %v809
      %v811 = vrot.slane %v299, 1
      %v812 = vsel %vm791, %v809, %v811
      %v813 = vrot.slane %v300, 1
      %v814 = vsel %vm791, %v811, %v813
      %v815 = vrot.slane %v301, 1
      %v816 = vsel %vm791, %v813, %v815
      %v817 = vrot.slane %v302, 1
      %v818 = vsel %vm791, %v815, %v817
      %v819 = vrot.slane %v303, 1
      %v820 = vsel %vm791, %v817, %v819
      %v822 = vsel %vm421, %v794, 0
      %v825 = vsel %vm421, %v796, 0
      %v828 = vsel %vm421, %v798, 0
      %v831 = vsel %vm421, %v800, 0
      %v834 = vsel %vm421, %v802, 0
      %v837 = vsel %vm421, %v804, 0
      %v840 = vsel %vm421, %v806, 0
      %v843 = vsel %vm421, %v808, 0
      %v846 = vsel %vm421, %v810, 0
      %v849 = vsel %vm421, %v812, 0
      %v852 = vsel %vm421, %v814, 0
      %v855 = vsel %vm421, %v816, 0
      %v858 = vsel %vm421, %v818, 0
      %v861 = vsel %vm421, %v820, 0
      %v864 = vsel %vm464, %v790, 0
      %866 = vmatprep.subr.bf16.mxu0 0
      %867 = vmatpush1.bf16.msra.mxu0 %v864
      %868 = vmatprep.subr.bf16.mxu0 0
      %869 = vmatpush1.bf16.msra.mxu0 0
      %870 = vmatprep.subr.bf16.mxu0 0
      %871 = vmatpush1.bf16.msra.mxu0 0
      %872 = vmatprep.subr.bf16.mxu0 0
      %873 = vmatpush1.bf16.msra.mxu0 0
      %874 = vmatprep.subr.bf16.mxu0 0
      %875 = vmatpush1.bf16.msra.mxu0 0
      %876 = vmatprep.subr.bf16.mxu0 0
      %877 = vmatpush1.bf16.msra.mxu0 0
      %878 = vmatprep.subr.bf16.mxu0 0
      %879 = vmatpush1.bf16.msra.mxu0 0
      %880 = vmatprep.subr.bf16.mxu0 0
      %881 = vmatpush1.bf16.msra.mxu0 0
      %882 = vmatprep.subr.bf16.mxu0 0
      %883 = vmatpush1.bf16.msra.mxu0 0
      %884 = vmatprep.subr.bf16.mxu0 0
      %885 = vmatpush1.bf16.msra.mxu0 0
      %886 = vmatprep.subr.bf16.mxu0 0
      %887 = vmatpush1.bf16.msra.mxu0 0
      %888 = vmatprep.subr.bf16.mxu0 0
      %889 = vmatpush1.bf16.msra.mxu0 0
      %890 = vmatprep.subr.bf16.mxu0 0
      %891 = vmatpush1.bf16.msra.mxu0 0
      %892 = vmatprep.subr.bf16.mxu0 0
      %893 = vmatpush1.bf16.msra.mxu0 0
      %894 = vmatprep.subr.bf16.mxu0 0
      %895 = vmatpush1.bf16.msra.mxu0 0
      %896 = vmatprep.subr.bf16.mxu0 0
      %897 = vmatpush1.bf16.msra.mxu0 0
      %898 = vmatprep.mubr.bf16.mxu0 0
      %899 = vmatmul.mubr.bf16.gmra.mrb[0].mxu0 %v822
      %v900 = vpop.f32.mrb[0].mxu0
      %v901 = vadd.f32 0.0, %v900
      %v902 = vpop.f32.mrb[0].mxu0
      %v903 = vpop.f32.mrb[0].mxu0
      %v904 = vadd.f32 0.0, %v903
      %v905 = vpop.f32.mrb[0].mxu0
      %906 = vmatprep.mubr.bf16.mxu0 0
      %907 = vmatmul.mubr.bf16.gmra.mrb[0].mxu0 %v825
      %v908 = vpop.f32.mrb[0].mxu0
      %v909 = vadd.f32 0.0, %v908
      %v910 = vpop.f32.mrb[0].mxu0
      %v911 = vpop.f32.mrb[0].mxu0
      %v912 = vadd.f32 0.0, %v911
      %v913 = vpop.f32.mrb[0].mxu0
      %914 = vmatprep.mubr.bf16.mxu0 0
      %915 = vmatmul.mubr.bf16.gmra.mrb[0].mxu0 %v828
      %v916 = vpop.f32.mrb[0].mxu0
      %v917 = vadd.f32 0.0, %v916
      %v918 = vpop.f32.mrb[0].mxu0
      %v919 = vpop.f32.mrb[0].mxu0
      %v920 = vadd.f32 0.0, %v919
      %v921 = vpop.f32.mrb[0].mxu0
      %922 = vmatprep.mubr.bf16.mxu0 0
      %923 = vmatmul.mubr.bf16.gmra.mrb[0].mxu0 %v831
      %v924 = vpop.f32.mrb[0].mxu0
      %v925 = vadd.f32 0.0, %v924
      %v926 = vpop.f32.mrb[0].mxu0
      %v927 = vpop.f32.mrb[0].mxu0
      %v928 = vadd.f32 0.0, %v927
      %v929 = vpop.f32.mrb[0].mxu0
      %930 = vmatprep.mubr.bf16.mxu0 0
      %931 = vmatmul.mubr.bf16.gmra.mrb[0].mxu0 %v834
      %v932 = vpop.f32.mrb[0].mxu0
      %v933 = vadd.f32 0.0, %v932
      %v934 = vpop.f32.mrb[0].mxu0
      %v935 = vpop.f32.mrb[0].mxu0
      %v936 = vadd.f32 0.0, %v935
      %v937 = vpop.f32.mrb[0].mxu0
      %938 = vmatprep.mubr.bf16.mxu0 0
      %939 = vmatmul.mubr.bf16.gmra.mrb[0].mxu0 %v837
      %v940 = vpop.f32.mrb[0].mxu0
      %v941 = vadd.f32 0.0, %v940
      %v942 = vpop.f32.mrb[0].mxu0
      %v943 = vpop.f32.mrb[0].mxu0
      %v944 = vadd.f32 0.0, %v943
      %v945 = vpop.f32.mrb[0].mxu0
      %946 = vmatprep.mubr.bf16.mxu0 0
      %947 = vmatmul.mubr.bf16.gmra.mrb[0].mxu0 %v840
      %v948 = vpop.f32.mrb[0].mxu0
      %v949 = vadd.f32 0.0, %v948
      %v950 = vpop.f32.mrb[0].mxu0
      %v951 = vpop.f32.mrb[0].mxu0
      %v952 = vadd.f32 0.0, %v951
      %v953 = vpop.f32.mrb[0].mxu0
      %954 = vmatprep.mubr.bf16.mxu0 0
      %955 = vmatmul.mubr.bf16.gmra.mrb[0].mxu0 %v843
      %v956 = vpop.f32.mrb[0].mxu0
      %v957 = vadd.f32 0.0, %v956
      %v958 = vpop.f32.mrb[0].mxu0
      %v959 = vpop.f32.mrb[0].mxu0
      %v960 = vadd.f32 0.0, %v959
      %v961 = vpop.f32.mrb[0].mxu0
      %962 = vmatprep.mubr.bf16.mxu0 0
      %963 = vmatmul.mubr.bf16.gmra.mrb[0].mxu0 %v846
      %v964 = vpop.f32.mrb[0].mxu0
      %v965 = vadd.f32 0.0, %v964
      %v966 = vpop.f32.mrb[0].mxu0
      %v967 = vpop.f32.mrb[0].mxu0
      %v968 = vadd.f32 0.0, %v967
      %v969 = vpop.f32.mrb[0].mxu0
      %970 = vmatprep.mubr.bf16.mxu0 0
      %971 = vmatmul.mubr.bf16.gmra.mrb[0].mxu0 %v849
      %v972 = vpop.f32.mrb[0].mxu0
      %v973 = vadd.f32 0.0, %v972
      %v974 = vpop.f32.mrb[0].mxu0
      %v975 = vpop.f32.mrb[0].mxu0
      %v976 = vadd.f32 0.0, %v975
      %v977 = vpop.f32.mrb[0].mxu0
      %978 = vmatprep.mubr.bf16.mxu0 0
      %979 = vmatmul.mubr.bf16.gmra.mrb[0].mxu0 %v852
      %v980 = vpop.f32.mrb[0].mxu0
      %v981 = vadd.f32 0.0, %v980
      %v982 = vpop.f32.mrb[0].mxu0
      %v983 = vpop.f32.mrb[0].mxu0
      %v984 = vadd.f32 0.0, %v983
      %v985 = vpop.f32.mrb[0].mxu0
      %986 = vmatprep.mubr.bf16.mxu0 0
      %987 = vmatmul.mubr.bf16.gmra.mrb[0].mxu0 %v855
      %v988 = vpop.f32.mrb[0].mxu0
      %v989 = vadd.f32 0.0, %v988
      %v990 = vpop.f32.mrb[0].mxu0
      %v991 = vpop.f32.mrb[0].mxu0
      %v992 = vadd.f32 0.0, %v991
      %v993 = vpop.f32.mrb[0].mxu0
      %994 = vmatprep.mubr.bf16.mxu0 0
      %995 = vmatmul.mubr.bf16.gmra.mrb[0].mxu0 %v858
      %v996 = vpop.f32.mrb[0].mxu0
      %v997 = vadd.f32 0.0, %v996
      %v998 = vpop.f32.mrb[0].mxu0
      %v999 = vpop.f32.mrb[0].mxu0
      %v1000 = vadd.f32 0.0, %v999
      %v1001 = vpop.f32.mrb[0].mxu0
      %1002 = vmatprep.mubr.bf16.mxu0 0
      %1003 = vmatmul.mubr.bf16.gmra.mrb[0].mxu0 %v861
      %v1004 = vpop.f32.mrb[0].mxu0
      %v1005 = vadd.f32 0.0, %v1004
      %v1006 = vpop.f32.mrb[0].mxu0
      %v1007 = vpop.f32.mrb[0].mxu0
      %v1008 = vadd.f32 0.0, %v1007
      %v1009 = vpop.f32.mrb[0].mxu0
      %1010 = vdwg.mxu0
      %v1011 = vadd.f32 %v679, %v901
      %v1012 = vadd.f32 %v682, %v904
      %v1013 = vadd.f32 %v687, %v909
      %v1014 = vadd.f32 %v690, %v912
      %v1015 = vadd.f32 %v695, %v917
      %v1016 = vadd.f32 %v698, %v920
      %v1017 = vadd.f32 %v703, %v925
      %v1018 = vadd.f32 %v706, %v928
      %v1019 = vadd.f32 %v711, %v933
      %v1020 = vadd.f32 %v714, %v936
      %v1021 = vadd.f32 %v719, %v941
      %v1022 = vadd.f32 %v722, %v944
      %v1023 = vadd.f32 %v727, %v949
      %v1024 = vadd.f32 %v730, %v952
      %v1025 = vadd.f32 %v735, %v957
      %v1026 = vadd.f32 %v738, %v960
      %v1027 = vadd.f32 %v743, %v965
      %v1028 = vadd.f32 %v746, %v968
      %v1029 = vadd.f32 %v751, %v973
      %v1030 = vadd.f32 %v754, %v976
      %v1031 = vadd.f32 %v759, %v981
      %v1032 = vadd.f32 %v762, %v984
      %v1033 = vadd.f32 %v767, %v989
      %v1034 = vadd.f32 %v770, %v992
      %v1035 = vadd.f32 %v775, %v997
      %v1036 = vadd.f32 %v778, %v1000
      %v1037 = vadd.f32 %v783, %v1005
      %v1038 = vadd.f32 %v786, %v1008
      %s1039 = scalar_lea.vmem %s1, 12
      %v1040 = vld [vmem:[%s1039] sm:$0xf]
      %v1042 = vunpack.c.l.b16 %v224
      %v1043 = vpack.c.b16 %v1042, %v288
      %v1045 = vsel %vm421, %v1043, 0
      %v1048 = vsel %vm464, %v1040, 0
      %1050 = vmatprep.subr.bf16.mxu0 0
      %1051 = vmatpush1.bf16.msra.mxu0 %v1048
      %1052 = vmatprep.subr.bf16.mxu0 0
      %1053 = vmatpush1.bf16.msra.mxu0 0
      %1054 = vmatprep.subr.bf16.mxu0 0
      %1055 = vmatpush1.bf16.msra.mxu0 0
      %1056 = vmatprep.subr.bf16.mxu0 0
      %1057 = vmatpush1.bf16.msra.mxu0 0
      %1058 = vmatprep.subr.bf16.mxu0 0
      %1059 = vmatpush1.bf16.msra.mxu0 0
      %1060 = vmatprep.subr.bf16.mxu0 0
      %1061 = vmatpush1.bf16.msra.mxu0 0
      %1062 = vmatprep.subr.bf16.mxu0 0
      %1063 = vmatpush1.bf16.msra.mxu0 0
      %1064 = vmatprep.subr.bf16.mxu0 0
      %1065 = vmatpush1.bf16.msra.mxu0 0
      %1066 = vmatprep.subr.bf16.mxu0 0
      %1067 = vmatpush1.bf16.msra.mxu0 0
      %1068 = vmatprep.subr.bf16.mxu0 0
      %1069 = vmatpush1.bf16.msra.mxu0 0
      %1070 = vmatprep.subr.bf16.mxu0 0
      %1071 = vmatpush1.bf16.msra.mxu0 0
      %1072 = vmatprep.subr.bf16.mxu0 0
      %1073 = vmatpush1.bf16.msra.mxu0 0
      %1074 = vmatprep.subr.bf16.mxu0 0
      %1075 = vmatpush1.bf16.msra.mxu0 0
      %1076 = vmatprep.subr.bf16.mxu0 0
      %1077 = vmatpush1.bf16.msra.mxu0 0
      %1078 = vmatprep.subr.bf16.mxu0 0
      %1079 = vmatpush1.bf16.msra.mxu0 0
      %1080 = vmatprep.subr.bf16.mxu0 0
      %1081 = vmatpush1.bf16.msra.mxu0 0
      %1082 = vmatprep.mubr.bf16.mxu0 0
      %1083 = vmatmul.mubr.bf16.gmra.mrb[0].mxu0 %v615
      %v1084 = vpop.f32.mrb[0].mxu0
      %v1085 = vadd.f32 0.0, %v1084
      %v1086 = vpop.f32.mrb[0].mxu0
      %v1087 = vpop.f32.mrb[0].mxu0
      %v1088 = vadd.f32 0.0, %v1087
      %v1089 = vpop.f32.mrb[0].mxu0
      %1090 = vmatprep.mubr.bf16.mxu0 0
      %1091 = vmatmul.mubr.bf16.gmra.mrb[0].mxu0 %v617
      %v1092 = vpop.f32.mrb[0].mxu0
      %v1093 = vadd.f32 0.0, %v1092
      %v1094 = vpop.f32.mrb[0].mxu0
      %v1095 = vpop.f32.mrb[0].mxu0
      %v1096 = vadd.f32 0.0, %v1095
      %v1097 = vpop.f32.mrb[0].mxu0
      %1098 = vmatprep.mubr.bf16.mxu0 0
      %1099 = vmatmul.mubr.bf16.gmra.mrb[0].mxu0 %v619
      %v1100 = vpop.f32.mrb[0].mxu0
      %v1101 = vadd.f32 0.0, %v1100
      %v1102 = vpop.f32.mrb[0].mxu0
      %v1103 = vpop.f32.mrb[0].mxu0
      %v1104 = vadd.f32 0.0, %v1103
      %v1105 = vpop.f32.mrb[0].mxu0
      %1106 = vmatprep.mubr.bf16.mxu0 0
      %1107 = vmatmul.mubr.bf16.gmra.mrb[0].mxu0 %v621
      %v1108 = vpop.f32.mrb[0].mxu0
      %v1109 = vadd.f32 0.0, %v1108
      %v1110 = vpop.f32.mrb[0].mxu0
      %v1111 = vpop.f32.mrb[0].mxu0
      %v1112 = vadd.f32 0.0, %v1111
      %v1113 = vpop.f32.mrb[0].mxu0
      %1114 = vmatprep.mubr.bf16.mxu0 0
      %1115 = vmatmul.mubr.bf16.gmra.mrb[0].mxu0 %v623
      %v1116 = vpop.f32.mrb[0].mxu0
      %v1117 = vadd.f32 0.0, %v1116
      %v1118 = vpop.f32.mrb[0].mxu0
      %v1119 = vpop.f32.mrb[0].mxu0
      %v1120 = vadd.f32 0.0, %v1119
      %v1121 = vpop.f32.mrb[0].mxu0
      %1122 = vmatprep.mubr.bf16.mxu0 0
      %1123 = vmatmul.mubr.bf16.gmra.mrb[0].mxu0 %v625
      %v1124 = vpop.f32.mrb[0].mxu0
      %v1125 = vadd.f32 0.0, %v1124
      %v1126 = vpop.f32.mrb[0].mxu0
      %v1127 = vpop.f32.mrb[0].mxu0
      %v1128 = vadd.f32 0.0, %v1127
      %v1129 = vpop.f32.mrb[0].mxu0
      %1130 = vmatprep.mubr.bf16.mxu0 0
      %1131 = vmatmul.mubr.bf16.gmra.mrb[0].mxu0 %v627
      %v1132 = vpop.f32.mrb[0].mxu0
      %v1133 = vadd.f32 0.0, %v1132
      %v1134 = vpop.f32.mrb[0].mxu0
      %v1135 = vpop.f32.mrb[0].mxu0
      %v1136 = vadd.f32 0.0, %v1135
      %v1137 = vpop.f32.mrb[0].mxu0
      %1138 = vmatprep.mubr.bf16.mxu0 0
      %1139 = vmatmul.mubr.bf16.gmra.mrb[0].mxu0 %v629
      %v1140 = vpop.f32.mrb[0].mxu0
      %v1141 = vadd.f32 0.0, %v1140
      %v1142 = vpop.f32.mrb[0].mxu0
      %v1143 = vpop.f32.mrb[0].mxu0
      %v1144 = vadd.f32 0.0, %v1143
      %v1145 = vpop.f32.mrb[0].mxu0
      %1146 = vmatprep.mubr.bf16.mxu0 0
      %1147 = vmatmul.mubr.bf16.gmra.mrb[0].mxu0 %v631
      %v1148 = vpop.f32.mrb[0].mxu0
      %v1149 = vadd.f32 0.0, %v1148
      %v1150 = vpop.f32.mrb[0].mxu0
      %v1151 = vpop.f32.mrb[0].mxu0
      %v1152 = vadd.f32 0.0, %v1151
      %v1153 = vpop.f32.mrb[0].mxu0
      %1154 = vmatprep.mubr.bf16.mxu0 0
      %1155 = vmatmul.mubr.bf16.gmra.mrb[0].mxu0 %v633
      %v1156 = vpop.f32.mrb[0].mxu0
      %v1157 = vadd.f32 0.0, %v1156
      %v1158 = vpop.f32.mrb[0].mxu0
      %v1159 = vpop.f32.mrb[0].mxu0
      %v1160 = vadd.f32 0.0, %v1159
      %v1161 = vpop.f32.mrb[0].mxu0
      %1162 = vmatprep.mubr.bf16.mxu0 0
      %1163 = vmatmul.mubr.bf16.gmra.mrb[0].mxu0 %v635
      %v1164 = vpop.f32.mrb[0].mxu0
      %v1165 = vadd.f32 0.0, %v1164
      %v1166 = vpop.f32.mrb[0].mxu0
      %v1167 = vpop.f32.mrb[0].mxu0
      %v1168 = vadd.f32 0.0, %v1167
      %v1169 = vpop.f32.mrb[0].mxu0
      %1170 = vmatprep.mubr.bf16.mxu0 0
      %1171 = vmatmul.mubr.bf16.gmra.mrb[0].mxu0 %v637
      %v1172 = vpop.f32.mrb[0].mxu0
      %v1173 = vadd.f32 0.0, %v1172
      %v1174 = vpop.f32.mrb[0].mxu0
      %v1175 = vpop.f32.mrb[0].mxu0
      %v1176 = vadd.f32 0.0, %v1175
      %v1177 = vpop.f32.mrb[0].mxu0
      %1178 = vmatprep.mubr.bf16.mxu0 0
      %1179 = vmatmul.mubr.bf16.gmra.mrb[0].mxu0 %v639
      %v1180 = vpop.f32.mrb[0].mxu0
      %v1181 = vadd.f32 0.0, %v1180
      %v1182 = vpop.f32.mrb[0].mxu0
      %v1183 = vpop.f32.mrb[0].mxu0
      %v1184 = vadd.f32 0.0, %v1183
      %v1185 = vpop.f32.mrb[0].mxu0
      %1186 = vmatprep.mubr.bf16.mxu0 0
      %1187 = vmatmul.mubr.bf16.gmra.mrb[0].mxu0 %v1045
      %v1188 = vpop.f32.mrb[0].mxu0
      %v1189 = vadd.f32 0.0, %v1188
      %v1190 = vpop.f32.mrb[0].mxu0
      %v1191 = vpop.f32.mrb[0].mxu0
      %v1192 = vadd.f32 0.0, %v1191
      %v1193 = vpop.f32.mrb[0].mxu0
      %1194 = vdwg.mxu0
      %v1195 = vadd.f32 %v1011, %v1085
      %v1196 = vadd.f32 %v1012, %v1088
      %v1197 = vadd.f32 %v1013, %v1093
      %v1198 = vadd.f32 %v1014, %v1096
      %v1199 = vadd.f32 %v1015, %v1101
      %v1200 = vadd.f32 %v1016, %v1104
      %v1201 = vadd.f32 %v1017, %v1109
      %v1202 = vadd.f32 %v1018, %v1112
      %v1203 = vadd.f32 %v1019, %v1117
      %v1204 = vadd.f32 %v1020, %v1120
      %v1205 = vadd.f32 %v1021, %v1125
      %v1206 = vadd.f32 %v1022, %v1128
      %v1207 = vadd.f32 %v1023, %v1133
      %v1208 = vadd.f32 %v1024, %v1136
      %v1209 = vadd.f32 %v1025, %v1141
      %v1210 = vadd.f32 %v1026, %v1144
      %v1211 = vadd.f32 %v1027, %v1149
      %v1212 = vadd.f32 %v1028, %v1152
      %v1213 = vadd.f32 %v1029, %v1157
      %v1214 = vadd.f32 %v1030, %v1160
      %v1215 = vadd.f32 %v1031, %v1165
      %v1216 = vadd.f32 %v1032, %v1168
      %v1217 = vadd.f32 %v1033, %v1173
      %v1218 = vadd.f32 %v1034, %v1176
      %v1219 = vadd.f32 %v1035, %v1181
      %v1220 = vadd.f32 %v1036, %v1184
      %v1221 = vadd.f32 %v1037, %v1189
      %v1222 = vadd.f32 %v1038, %v1192
      %s1223 = scalar_lea.vmem %s1, 16
      %v1224 = vld [vmem:[%s1223] sm:$0xf]
      %v1226 = vunpack.c.l.b16 %v225
      %v1227 = vpack.c.b16 %v1226, %v1226
      %v1228 = vshll.u32 %v1043, 16
      %v1230 = vrot.slane %v1228, 1
      %v1231 = vsel %vm304, %v415, %v1230
      %v1232 = vshrl.u32 %v1043, 16
      %v1234 = vor.u32 %v1232, %v1230
      %v1236 = vshll.u32 %v1227, 16
      %v1238 = vrot.slane %v1236, 1
      %v1239 = vsel %vm304, %v1234, %v1238
      %v1241 = vsel %vm421, %v1231, 0
      %v1244 = vsel %vm421, %v1239, 0
      %v1247 = vsel %vm464, %v1224, 0
      %1249 = vmatprep.subr.bf16.mxu0 0
      %1250 = vmatpush1.bf16.msra.mxu0 %v1247
      %1251 = vmatprep.subr.bf16.mxu0 0
      %1252 = vmatpush1.bf16.msra.mxu0 0
      %1253 = vmatprep.subr.bf16.mxu0 0
      %1254 = vmatpush1.bf16.msra.mxu0 0
      %1255 = vmatprep.subr.bf16.mxu0 0
      %1256 = vmatpush1.bf16.msra.mxu0 0
      %1257 = vmatprep.subr.bf16.mxu0 0
      %1258 = vmatpush1.bf16.msra.mxu0 0
      %1259 = vmatprep.subr.bf16.mxu0 0
      %1260 = vmatpush1.bf16.msra.mxu0 0
      %1261 = vmatprep.subr.bf16.mxu0 0
      %1262 = vmatpush1.bf16.msra.mxu0 0
      %1263 = vmatprep.subr.bf16.mxu0 0
      %1264 = vmatpush1.bf16.msra.mxu0 0
      %1265 = vmatprep.subr.bf16.mxu0 0
      %1266 = vmatpush1.bf16.msra.mxu0 0
      %1267 = vmatprep.subr.bf16.mxu0 0
      %1268 = vmatpush1.bf16.msra.mxu0 0
      %1269 = vmatprep.subr.bf16.mxu0 0
      %1270 = vmatpush1.bf16.msra.mxu0 0
      %1271 = vmatprep.subr.bf16.mxu0 0
      %1272 = vmatpush1.bf16.msra.mxu0 0
      %1273 = vmatprep.subr.bf16.mxu0 0
      %1274 = vmatpush1.bf16.msra.mxu0 0
      %1275 = vmatprep.subr.bf16.mxu0 0
      %1276 = vmatpush1.bf16.msra.mxu0 0
      %1277 = vmatprep.subr.bf16.mxu0 0
      %1278 = vmatpush1.bf16.msra.mxu0 0
      %1279 = vmatprep.subr.bf16.mxu0 0
      %1280 = vmatpush1.bf16.msra.mxu0 0
      %1281 = vmatprep.mubr.bf16.mxu0 0
      %1282 = vmatmul.mubr.bf16.gmra.mrb[0].mxu0 %v426
      %v1283 = vpop.f32.mrb[0].mxu0
      %v1284 = vadd.f32 0.0, %v1283
      %v1285 = vpop.f32.mrb[0].mxu0
      %v1286 = vpop.f32.mrb[0].mxu0
      %v1287 = vadd.f32 0.0, %v1286
      %v1288 = vpop.f32.mrb[0].mxu0
      %1289 = vmatprep.mubr.bf16.mxu0 0
      %1290 = vmatmul.mubr.bf16.gmra.mrb[0].mxu0 %v429
      %v1291 = vpop.f32.mrb[0].mxu0
      %v1292 = vadd.f32 0.0, %v1291
      %v1293 = vpop.f32.mrb[0].mxu0
      %v1294 = vpop.f32.mrb[0].mxu0
      %v1295 = vadd.f32 0.0, %v1294
      %v1296 = vpop.f32.mrb[0].mxu0
      %1297 = vmatprep.mubr.bf16.mxu0 0
      %1298 = vmatmul.mubr.bf16.gmra.mrb[0].mxu0 %v432
      %v1299 = vpop.f32.mrb[0].mxu0
      %v1300 = vadd.f32 0.0, %v1299
      %v1301 = vpop.f32.mrb[0].mxu0
      %v1302 = vpop.f32.mrb[0].mxu0
      %v1303 = vadd.f32 0.0, %v1302
      %v1304 = vpop.f32.mrb[0].mxu0
      %1305 = vmatprep.mubr.bf16.mxu0 0
      %1306 = vmatmul.mubr.bf16.gmra.mrb[0].mxu0 %v435
      %v1307 = vpop.f32.mrb[0].mxu0
      %v1308 = vadd.f32 0.0, %v1307
      %v1309 = vpop.f32.mrb[0].mxu0
      %v1310 = vpop.f32.mrb[0].mxu0
      %v1311 = vadd.f32 0.0, %v1310
      %v1312 = vpop.f32.mrb[0].mxu0
      %1313 = vmatprep.mubr.bf16.mxu0 0
      %1314 = vmatmul.mubr.bf16.gmra.mrb[0].mxu0 %v438
      %v1315 = vpop.f32.mrb[0].mxu0
      %v1316 = vadd.f32 0.0, %v1315
      %v1317 = vpop.f32.mrb[0].mxu0
      %v1318 = vpop.f32.mrb[0].mxu0
      %v1319 = vadd.f32 0.0, %v1318
      %v1320 = vpop.f32.mrb[0].mxu0
      %1321 = vmatprep.mubr.bf16.mxu0 0
      %1322 = vmatmul.mubr.bf16.gmra.mrb[0].mxu0 %v441
      %v1323 = vpop.f32.mrb[0].mxu0
      %v1324 = vadd.f32 0.0, %v1323
      %v1325 = vpop.f32.mrb[0].mxu0
      %v1326 = vpop.f32.mrb[0].mxu0
      %v1327 = vadd.f32 0.0, %v1326
      %v1328 = vpop.f32.mrb[0].mxu0
      %1329 = vmatprep.mubr.bf16.mxu0 0
      %1330 = vmatmul.mubr.bf16.gmra.mrb[0].mxu0 %v444
      %v1331 = vpop.f32.mrb[0].mxu0
      %v1332 = vadd.f32 0.0, %v1331
      %v1333 = vpop.f32.mrb[0].mxu0
      %v1334 = vpop.f32.mrb[0].mxu0
      %v1335 = vadd.f32 0.0, %v1334
      %v1336 = vpop.f32.mrb[0].mxu0
      %1337 = vmatprep.mubr.bf16.mxu0 0
      %1338 = vmatmul.mubr.bf16.gmra.mrb[0].mxu0 %v447
      %v1339 = vpop.f32.mrb[0].mxu0
      %v1340 = vadd.f32 0.0, %v1339
      %v1341 = vpop.f32.mrb[0].mxu0
      %v1342 = vpop.f32.mrb[0].mxu0
      %v1343 = vadd.f32 0.0, %v1342
      %v1344 = vpop.f32.mrb[0].mxu0
      %1345 = vmatprep.mubr.bf16.mxu0 0
      %1346 = vmatmul.mubr.bf16.gmra.mrb[0].mxu0 %v450
      %v1347 = vpop.f32.mrb[0].mxu0
      %v1348 = vadd.f32 0.0, %v1347
      %v1349 = vpop.f32.mrb[0].mxu0
      %v1350 = vpop.f32.mrb[0].mxu0
      %v1351 = vadd.f32 0.0, %v1350
      %v1352 = vpop.f32.mrb[0].mxu0
      %1353 = vmatprep.mubr.bf16.mxu0 0
      %1354 = vmatmul.mubr.bf16.gmra.mrb[0].mxu0 %v453
      %v1355 = vpop.f32.mrb[0].mxu0
      %v1356 = vadd.f32 0.0, %v1355
      %v1357 = vpop.f32.mrb[0].mxu0
      %v1358 = vpop.f32.mrb[0].mxu0
      %v1359 = vadd.f32 0.0, %v1358
      %v1360 = vpop.f32.mrb[0].mxu0
      %1361 = vmatprep.mubr.bf16.mxu0 0
      %1362 = vmatmul.mubr.bf16.gmra.mrb[0].mxu0 %v456
      %v1363 = vpop.f32.mrb[0].mxu0
      %v1364 = vadd.f32 0.0, %v1363
      %v1365 = vpop.f32.mrb[0].mxu0
      %v1366 = vpop.f32.mrb[0].mxu0
      %v1367 = vadd.f32 0.0, %v1366
      %v1368 = vpop.f32.mrb[0].mxu0
      %1369 = vmatprep.mubr.bf16.mxu0 0
      %1370 = vmatmul.mubr.bf16.gmra.mrb[0].mxu0 %v459
      %v1371 = vpop.f32.mrb[0].mxu0
      %v1372 = vadd.f32 0.0, %v1371
      %v1373 = vpop.f32.mrb[0].mxu0
      %v1374 = vpop.f32.mrb[0].mxu0
      %v1375 = vadd.f32 0.0, %v1374
      %v1376 = vpop.f32.mrb[0].mxu0
      %1377 = vmatprep.mubr.bf16.mxu0 0
      %1378 = vmatmul.mubr.bf16.gmra.mrb[0].mxu0 %v1241
      %v1379 = vpop.f32.mrb[0].mxu0
      %v1380 = vadd.f32 0.0, %v1379
      %v1381 = vpop.f32.mrb[0].mxu0
      %v1382 = vpop.f32.mrb[0].mxu0
      %v1383 = vadd.f32 0.0, %v1382
      %v1384 = vpop.f32.mrb[0].mxu0
      %1385 = vmatprep.mubr.bf16.mxu0 0
      %1386 = vmatmul.mubr.bf16.gmra.mrb[0].mxu0 %v1244
      %v1387 = vpop.f32.mrb[0].mxu0
      %v1388 = vadd.f32 0.0, %v1387
      %v1389 = vpop.f32.mrb[0].mxu0
      %v1390 = vpop.f32.mrb[0].mxu0
      %v1391 = vadd.f32 0.0, %v1390
      %v1392 = vpop.f32.mrb[0].mxu0
      %1393 = vdwg.mxu0
      %v1394 = vadd.f32 %v1195, %v1284
      %v1395 = vadd.f32 %v1196, %v1287
      %v1396 = vadd.f32 %v1197, %v1292
      %v1397 = vadd.f32 %v1198, %v1295
      %v1398 = vadd.f32 %v1199, %v1300
      %v1399 = vadd.f32 %v1200, %v1303
      %v1400 = vadd.f32 %v1201, %v1308
      %v1401 = vadd.f32 %v1202, %v1311
      %v1402 = vadd.f32 %v1203, %v1316
      %v1403 = vadd.f32 %v1204, %v1319
      %v1404 = vadd.f32 %v1205, %v1324
      %v1405 = vadd.f32 %v1206, %v1327
      %v1406 = vadd.f32 %v1207, %v1332
      %v1407 = vadd.f32 %v1208, %v1335
      %v1408 = vadd.f32 %v1209, %v1340
      %v1409 = vadd.f32 %v1210, %v1343
      %v1410 = vadd.f32 %v1211, %v1348
      %v1411 = vadd.f32 %v1212, %v1351
      %v1412 = vadd.f32 %v1213, %v1356
      %v1413 = vadd.f32 %v1214, %v1359
      %v1414 = vadd.f32 %v1215, %v1364
      %v1415 = vadd.f32 %v1216, %v1367
      %v1416 = vadd.f32 %v1217, %v1372
      %v1417 = vadd.f32 %v1218, %v1375
      %v1418 = vadd.f32 %v1219, %v1380
      %v1419 = vadd.f32 %v1220, %v1383
      %v1420 = vadd.f32 %v1221, %v1388
      %v1421 = vadd.f32 %v1222, %v1391
      %s1422 = scalar_lea.vmem %s1, 20
      %v1423 = vld [vmem:[%s1422] sm:$0xf]
      %v1424 = vrot.slane %v1043, 1
      %v1425 = vsel %vm791, %v817, %v1424
      %v1426 = vrot.slane %v1227, 1
      %v1427 = vsel %vm791, %v1424, %v1426
      %v1429 = vsel %vm421, %v1425, 0
      %v1432 = vsel %vm421, %v1427, 0
      %v1435 = vsel %vm464, %v1423, 0
      %1437 = vmatprep.subr.bf16.mxu0 0
      %1438 = vmatpush1.bf16.msra.mxu0 %v1435
      %1439 = vmatprep.subr.bf16.mxu0 0
      %1440 = vmatpush1.bf16.msra.mxu0 0
      %1441 = vmatprep.subr.bf16.mxu0 0
      %1442 = vmatpush1.bf16.msra.mxu0 0
      %1443 = vmatprep.subr.bf16.mxu0 0
      %1444 = vmatpush1.bf16.msra.mxu0 0
      %1445 = vmatprep.subr.bf16.mxu0 0
      %1446 = vmatpush1.bf16.msra.mxu0 0
      %1447 = vmatprep.subr.bf16.mxu0 0
      %1448 = vmatpush1.bf16.msra.mxu0 0
      %1449 = vmatprep.subr.bf16.mxu0 0
      %1450 = vmatpush1.bf16.msra.mxu0 0
      %1451 = vmatprep.subr.bf16.mxu0 0
      %1452 = vmatpush1.bf16.msra.mxu0 0
      %1453 = vmatprep.subr.bf16.mxu0 0
      %1454 = vmatpush1.bf16.msra.mxu0 0
      %1455 = vmatprep.subr.bf16.mxu0 0
      %1456 = vmatpush1.bf16.msra.mxu0 0
      %1457 = vmatprep.subr.bf16.mxu0 0
      %1458 = vmatpush1.bf16.msra.mxu0 0
      %1459 = vmatprep.subr.bf16.mxu0 0
      %1460 = vmatpush1.bf16.msra.mxu0 0
      %1461 = vmatprep.subr.bf16.mxu0 0
      %1462 = vmatpush1.bf16.msra.mxu0 0
      %1463 = vmatprep.subr.bf16.mxu0 0
      %1464 = vmatpush1.bf16.msra.mxu0 0
      %1465 = vmatprep.subr.bf16.mxu0 0
      %1466 = vmatpush1.bf16.msra.mxu0 0
      %1467 = vmatprep.subr.bf16.mxu0 0
      %1468 = vmatpush1.bf16.msra.mxu0 0
      %1469 = vmatprep.mubr.bf16.mxu0 0
      %1470 = vmatmul.mubr.bf16.gmra.mrb[0].mxu0 %v825
      %v1471 = vpop.f32.mrb[0].mxu0
      %v1472 = vadd.f32 0.0, %v1471
      %v1473 = vpop.f32.mrb[0].mxu0
      %v1474 = vpop.f32.mrb[0].mxu0
      %v1475 = vadd.f32 0.0, %v1474
      %v1476 = vpop.f32.mrb[0].mxu0
      %1477 = vmatprep.mubr.bf16.mxu0 0
      %1478 = vmatmul.mubr.bf16.gmra.mrb[0].mxu0 %v828
      %v1479 = vpop.f32.mrb[0].mxu0
      %v1480 = vadd.f32 0.0, %v1479
      %v1481 = vpop.f32.mrb[0].mxu0
      %v1482 = vpop.f32.mrb[0].mxu0
      %v1483 = vadd.f32 0.0, %v1482
      %v1484 = vpop.f32.mrb[0].mxu0
      %1485 = vmatprep.mubr.bf16.mxu0 0
      %1486 = vmatmul.mubr.bf16.gmra.mrb[0].mxu0 %v831
      %v1487 = vpop.f32.mrb[0].mxu0
      %v1488 = vadd.f32 0.0, %v1487
      %v1489 = vpop.f32.mrb[0].mxu0
      %v1490 = vpop.f32.mrb[0].mxu0
      %v1491 = vadd.f32 0.0, %v1490
      %v1492 = vpop.f32.mrb[0].mxu0
      %1493 = vmatprep.mubr.bf16.mxu0 0
      %1494 = vmatmul.mubr.bf16.gmra.mrb[0].mxu0 %v834
      %v1495 = vpop.f32.mrb[0].mxu0
      %v1496 = vadd.f32 0.0, %v1495
      %v1497 = vpop.f32.mrb[0].mxu0
      %v1498 = vpop.f32.mrb[0].mxu0
      %v1499 = vadd.f32 0.0, %v1498
      %v1500 = vpop.f32.mrb[0].mxu0
      %1501 = vmatprep.mubr.bf16.mxu0 0
      %1502 = vmatmul.mubr.bf16.gmra.mrb[0].mxu0 %v837
      %v1503 = vpop.f32.mrb[0].mxu0
      %v1504 = vadd.f32 0.0, %v1503
      %v1505 = vpop.f32.mrb[0].mxu0
      %v1506 = vpop.f32.mrb[0].mxu0
      %v1507 = vadd.f32 0.0, %v1506
      %v1508 = vpop.f32.mrb[0].mxu0
      %1509 = vmatprep.mubr.bf16.mxu0 0
      %1510 = vmatmul.mubr.bf16.gmra.mrb[0].mxu0 %v840
      %v1511 = vpop.f32.mrb[0].mxu0
      %v1512 = vadd.f32 0.0, %v1511
      %v1513 = vpop.f32.mrb[0].mxu0
      %v1514 = vpop.f32.mrb[0].mxu0
      %v1515 = vadd.f32 0.0, %v1514
      %v1516 = vpop.f32.mrb[0].mxu0
      %1517 = vmatprep.mubr.bf16.mxu0 0
      %1518 = vmatmul.mubr.bf16.gmra.mrb[0].mxu0 %v843
      %v1519 = vpop.f32.mrb[0].mxu0
      %v1520 = vadd.f32 0.0, %v1519
      %v1521 = vpop.f32.mrb[0].mxu0
      %v1522 = vpop.f32.mrb[0].mxu0
      %v1523 = vadd.f32 0.0, %v1522
      %v1524 = vpop.f32.mrb[0].mxu0
      %1525 = vmatprep.mubr.bf16.mxu0 0
      %1526 = vmatmul.mubr.bf16.gmra.mrb[0].mxu0 %v846
      %v1527 = vpop.f32.mrb[0].mxu0
      %v1528 = vadd.f32 0.0, %v1527
      %v1529 = vpop.f32.mrb[0].mxu0
      %v1530 = vpop.f32.mrb[0].mxu0
      %v1531 = vadd.f32 0.0, %v1530
      %v1532 = vpop.f32.mrb[0].mxu0
      %1533 = vmatprep.mubr.bf16.mxu0 0
      %1534 = vmatmul.mubr.bf16.gmra.mrb[0].mxu0 %v849
      %v1535 = vpop.f32.mrb[0].mxu0
      %v1536 = vadd.f32 0.0, %v1535
      %v1537 = vpop.f32.mrb[0].mxu0
      %v1538 = vpop.f32.mrb[0].mxu0
      %v1539 = vadd.f32 0.0, %v1538
      %v1540 = vpop.f32.mrb[0].mxu0
      %1541 = vmatprep.mubr.bf16.mxu0 0
      %1542 = vmatmul.mubr.bf16.gmra.mrb[0].mxu0 %v852
      %v1543 = vpop.f32.mrb[0].mxu0
      %v1544 = vadd.f32 0.0, %v1543
      %v1545 = vpop.f32.mrb[0].mxu0
      %v1546 = vpop.f32.mrb[0].mxu0
      %v1547 = vadd.f32 0.0, %v1546
      %v1548 = vpop.f32.mrb[0].mxu0
      %1549 = vmatprep.mubr.bf16.mxu0 0
      %1550 = vmatmul.mubr.bf16.gmra.mrb[0].mxu0 %v855
      %v1551 = vpop.f32.mrb[0].mxu0
      %v1552 = vadd.f32 0.0, %v1551
      %v1553 = vpop.f32.mrb[0].mxu0
      %v1554 = vpop.f32.mrb[0].mxu0
      %v1555 = vadd.f32 0.0, %v1554
      %v1556 = vpop.f32.mrb[0].mxu0
      %1557 = vmatprep.mubr.bf16.mxu0 0
      %1558 = vmatmul.mubr.bf16.gmra.mrb[0].mxu0 %v858
      %v1559 = vpop.f32.mrb[0].mxu0
      %v1560 = vadd.f32 0.0, %v1559
      %v1561 = vpop.f32.mrb[0].mxu0
      %v1562 = vpop.f32.mrb[0].mxu0
      %v1563 = vadd.f32 0.0, %v1562
      %v1564 = vpop.f32.mrb[0].mxu0
      %1565 = vmatprep.mubr.bf16.mxu0 0
      %1566 = vmatmul.mubr.bf16.gmra.mrb[0].mxu0 %v1429
      %v1567 = vpop.f32.mrb[0].mxu0
      %v1568 = vadd.f32 0.0, %v1567
      %v1569 = vpop.f32.mrb[0].mxu0
      %v1570 = vpop.f32.mrb[0].mxu0
      %v1571 = vadd.f32 0.0, %v1570
      %v1572 = vpop.f32.mrb[0].mxu0
      %1573 = vmatprep.mubr.bf16.mxu0 0
      %1574 = vmatmul.mubr.bf16.gmra.mrb[0].mxu0 %v1432
      %v1575 = vpop.f32.mrb[0].mxu0
      %v1576 = vadd.f32 0.0, %v1575
      %v1577 = vpop.f32.mrb[0].mxu0
      %v1578 = vpop.f32.mrb[0].mxu0
      %v1579 = vadd.f32 0.0, %v1578
      %v1580 = vpop.f32.mrb[0].mxu0
      %1581 = vdwg.mxu0
      %v1582 = vadd.f32 %v1394, %v1472
      %v1583 = vadd.f32 %v1395, %v1475
      %v1584 = vadd.f32 %v1396, %v1480
      %v1585 = vadd.f32 %v1397, %v1483
      %v1586 = vadd.f32 %v1398, %v1488
      %v1587 = vadd.f32 %v1399, %v1491
      %v1588 = vadd.f32 %v1400, %v1496
      %v1589 = vadd.f32 %v1401, %v1499
      %v1590 = vadd.f32 %v1402, %v1504
      %v1591 = vadd.f32 %v1403, %v1507
      %v1592 = vadd.f32 %v1404, %v1512
      %v1593 = vadd.f32 %v1405, %v1515
      %v1594 = vadd.f32 %v1406, %v1520
      %v1595 = vadd.f32 %v1407, %v1523
      %v1596 = vadd.f32 %v1408, %v1528
      %v1597 = vadd.f32 %v1409, %v1531
      %v1598 = vadd.f32 %v1410, %v1536
      %v1599 = vadd.f32 %v1411, %v1539
      %v1600 = vadd.f32 %v1412, %v1544
      %v1601 = vadd.f32 %v1413, %v1547
      %v1602 = vadd.f32 %v1414, %v1552
      %v1603 = vadd.f32 %v1415, %v1555
      %v1604 = vadd.f32 %v1416, %v1560
      %v1605 = vadd.f32 %v1417, %v1563
      %v1606 = vadd.f32 %v1418, %v1568
      %v1607 = vadd.f32 %v1419, %v1571
      %v1608 = vadd.f32 %v1420, %v1576
      %v1609 = vadd.f32 %v1421, %v1579
      %s1610 = scalar_lea.vmem %s1, 24
      %v1611 = vld [vmem:[%s1610] sm:$0xf]
      %v1613 = vunpack.c.l.b16 %v226
      %v1614 = vpack.c.b16 %v1613, %v1226
      %v1616 = vsel %vm421, %v1614, 0
      %v1619 = vsel %vm464, %v1611, 0
      %1621 = vmatprep.subr.bf16.mxu0 0
      %1622 = vmatpush1.bf16.msra.mxu0 %v1619
      %1623 = vmatprep.subr.bf16.mxu0 0
      %1624 = vmatpush1.bf16.msra.mxu0 0
      %1625 = vmatprep.subr.bf16.mxu0 0
      %1626 = vmatpush1.bf16.msra.mxu0 0
      %1627 = vmatprep.subr.bf16.mxu0 0
      %1628 = vmatpush1.bf16.msra.mxu0 0
      %1629 = vmatprep.subr.bf16.mxu0 0
      %1630 = vmatpush1.bf16.msra.mxu0 0
      %1631 = vmatprep.subr.bf16.mxu0 0
      %1632 = vmatpush1.bf16.msra.mxu0 0
      %1633 = vmatprep.subr.bf16.mxu0 0
      %1634 = vmatpush1.bf16.msra.mxu0 0
      %1635 = vmatprep.subr.bf16.mxu0 0
      %1636 = vmatpush1.bf16.msra.mxu0 0
      %1637 = vmatprep.subr.bf16.mxu0 0
      %1638 = vmatpush1.bf16.msra.mxu0 0
      %1639 = vmatprep.subr.bf16.mxu0 0
      %1640 = vmatpush1.bf16.msra.mxu0 0
      %1641 = vmatprep.subr.bf16.mxu0 0
      %1642 = vmatpush1.bf16.msra.mxu0 0
      %1643 = vmatprep.subr.bf16.mxu0 0
      %1644 = vmatpush1.bf16.msra.mxu0 0
      %1645 = vmatprep.subr.bf16.mxu0 0
      %1646 = vmatpush1.bf16.msra.mxu0 0
      %1647 = vmatprep.subr.bf16.mxu0 0
      %1648 = vmatpush1.bf16.msra.mxu0 0
      %1649 = vmatprep.subr.bf16.mxu0 0
      %1650 = vmatpush1.bf16.msra.mxu0 0
      %1651 = vmatprep.subr.bf16.mxu0 0
      %1652 = vmatpush1.bf16.msra.mxu0 0
      %1653 = vmatprep.mubr.bf16.mxu0 0
      %1654 = vmatmul.mubr.bf16.gmra.mrb[0].mxu0 %v617
      %v1655 = vpop.f32.mrb[0].mxu0
      %v1656 = vadd.f32 0.0, %v1655
      %v1657 = vpop.f32.mrb[0].mxu0
      %v1658 = vpop.f32.mrb[0].mxu0
      %v1659 = vadd.f32 0.0, %v1658
      %v1660 = vpop.f32.mrb[0].mxu0
      %1661 = vmatprep.mubr.bf16.mxu0 0
      %1662 = vmatmul.mubr.bf16.gmra.mrb[0].mxu0 %v619
      %v1663 = vpop.f32.mrb[0].mxu0
      %v1664 = vadd.f32 0.0, %v1663
      %v1665 = vpop.f32.mrb[0].mxu0
      %v1666 = vpop.f32.mrb[0].mxu0
      %v1667 = vadd.f32 0.0, %v1666
      %v1668 = vpop.f32.mrb[0].mxu0
      %1669 = vmatprep.mubr.bf16.mxu0 0
      %1670 = vmatmul.mubr.bf16.gmra.mrb[0].mxu0 %v621
      %v1671 = vpop.f32.mrb[0].mxu0
      %v1672 = vadd.f32 0.0, %v1671
      %v1673 = vpop.f32.mrb[0].mxu0
      %v1674 = vpop.f32.mrb[0].mxu0
      %v1675 = vadd.f32 0.0, %v1674
      %v1676 = vpop.f32.mrb[0].mxu0
      %1677 = vmatprep.mubr.bf16.mxu0 0
      %1678 = vmatmul.mubr.bf16.gmra.mrb[0].mxu0 %v623
      %v1679 = vpop.f32.mrb[0].mxu0
      %v1680 = vadd.f32 0.0, %v1679
      %v1681 = vpop.f32.mrb[0].mxu0
      %v1682 = vpop.f32.mrb[0].mxu0
      %v1683 = vadd.f32 0.0, %v1682
      %v1684 = vpop.f32.mrb[0].mxu0
      %1685 = vmatprep.mubr.bf16.mxu0 0
      %1686 = vmatmul.mubr.bf16.gmra.mrb[0].mxu0 %v625
      %v1687 = vpop.f32.mrb[0].mxu0
      %v1688 = vadd.f32 0.0, %v1687
      %v1689 = vpop.f32.mrb[0].mxu0
      %v1690 = vpop.f32.mrb[0].mxu0
      %v1691 = vadd.f32 0.0, %v1690
      %v1692 = vpop.f32.mrb[0].mxu0
      %1693 = vmatprep.mubr.bf16.mxu0 0
      %1694 = vmatmul.mubr.bf16.gmra.mrb[0].mxu0 %v627
      %v1695 = vpop.f32.mrb[0].mxu0
      %v1696 = vadd.f32 0.0, %v1695
      %v1697 = vpop.f32.mrb[0].mxu0
      %v1698 = vpop.f32.mrb[0].mxu0
      %v1699 = vadd.f32 0.0, %v1698
      %v1700 = vpop.f32.mrb[0].mxu0
      %1701 = vmatprep.mubr.bf16.mxu0 0
      %1702 = vmatmul.mubr.bf16.gmra.mrb[0].mxu0 %v629
      %v1703 = vpop.f32.mrb[0].mxu0
      %v1704 = vadd.f32 0.0, %v1703
      %v1705 = vpop.f32.mrb[0].mxu0
      %v1706 = vpop.f32.mrb[0].mxu0
      %v1707 = vadd.f32 0.0, %v1706
      %v1708 = vpop.f32.mrb[0].mxu0
      %1709 = vmatprep.mubr.bf16.mxu0 0
      %1710 = vmatmul.mubr.bf16.gmra.mrb[0].mxu0 %v631
      %v1711 = vpop.f32.mrb[0].mxu0
      %v1712 = vadd.f32 0.0, %v1711
      %v1713 = vpop.f32.mrb[0].mxu0
      %v1714 = vpop.f32.mrb[0].mxu0
      %v1715 = vadd.f32 0.0, %v1714
      %v1716 = vpop.f32.mrb[0].mxu0
      %1717 = vmatprep.mubr.bf16.mxu0 0
      %1718 = vmatmul.mubr.bf16.gmra.mrb[0].mxu0 %v633
      %v1719 = vpop.f32.mrb[0].mxu0
      %v1720 = vadd.f32 0.0, %v1719
      %v1721 = vpop.f32.mrb[0].mxu0
      %v1722 = vpop.f32.mrb[0].mxu0
      %v1723 = vadd.f32 0.0, %v1722
      %v1724 = vpop.f32.mrb[0].mxu0
      %1725 = vmatprep.mubr.bf16.mxu0 0
      %1726 = vmatmul.mubr.bf16.gmra.mrb[0].mxu0 %v635
      %v1727 = vpop.f32.mrb[0].mxu0
      %v1728 = vadd.f32 0.0, %v1727
      %v1729 = vpop.f32.mrb[0].mxu0
      %v1730 = vpop.f32.mrb[0].mxu0
      %v1731 = vadd.f32 0.0, %v1730
      %v1732 = vpop.f32.mrb[0].mxu0
      %1733 = vmatprep.mubr.bf16.mxu0 0
      %1734 = vmatmul.mubr.bf16.gmra.mrb[0].mxu0 %v637
      %v1735 = vpop.f32.mrb[0].mxu0
      %v1736 = vadd.f32 0.0, %v1735
      %v1737 = vpop.f32.mrb[0].mxu0
      %v1738 = vpop.f32.mrb[0].mxu0
      %v1739 = vadd.f32 0.0, %v1738
      %v1740 = vpop.f32.mrb[0].mxu0
      %1741 = vmatprep.mubr.bf16.mxu0 0
      %1742 = vmatmul.mubr.bf16.gmra.mrb[0].mxu0 %v639
      %v1743 = vpop.f32.mrb[0].mxu0
      %v1744 = vadd.f32 0.0, %v1743
      %v1745 = vpop.f32.mrb[0].mxu0
      %v1746 = vpop.f32.mrb[0].mxu0
      %v1747 = vadd.f32 0.0, %v1746
      %v1748 = vpop.f32.mrb[0].mxu0
      %1749 = vmatprep.mubr.bf16.mxu0 0
      %1750 = vmatmul.mubr.bf16.gmra.mrb[0].mxu0 %v1045
      %v1751 = vpop.f32.mrb[0].mxu0
      %v1752 = vadd.f32 0.0, %v1751
      %v1753 = vpop.f32.mrb[0].mxu0
      %v1754 = vpop.f32.mrb[0].mxu0
      %v1755 = vadd.f32 0.0, %v1754
      %v1756 = vpop.f32.mrb[0].mxu0
      %1757 = vmatprep.mubr.bf16.mxu0 0
      %1758 = vmatmul.mubr.bf16.gmra.mrb[0].mxu0 %v1616
      %v1759 = vpop.f32.mrb[0].mxu0
      %v1760 = vadd.f32 0.0, %v1759
      %v1761 = vpop.f32.mrb[0].mxu0
      %v1762 = vpop.f32.mrb[0].mxu0
      %v1763 = vadd.f32 0.0, %v1762
      %v1764 = vpop.f32.mrb[0].mxu0
      %1765 = vdwg.mxu0
      %v1766 = vadd.f32 %v1582, %v1656
      %v1767 = vadd.f32 %v1583, %v1659
      %v1768 = vadd.f32 %v1584, %v1664
      %v1769 = vadd.f32 %v1585, %v1667
      %v1770 = vadd.f32 %v1586, %v1672
      %v1771 = vadd.f32 %v1587, %v1675
      %v1772 = vadd.f32 %v1588, %v1680
      %v1773 = vadd.f32 %v1589, %v1683
      %v1774 = vadd.f32 %v1590, %v1688
      %v1775 = vadd.f32 %v1591, %v1691
      %v1776 = vadd.f32 %v1592, %v1696
      %v1777 = vadd.f32 %v1593, %v1699
      %v1778 = vadd.f32 %v1594, %v1704
      %v1779 = vadd.f32 %v1595, %v1707
      %v1780 = vadd.f32 %v1596, %v1712
      %v1781 = vadd.f32 %v1597, %v1715
      %v1782 = vadd.f32 %v1598, %v1720
      %v1783 = vadd.f32 %v1599, %v1723
      %v1784 = vadd.f32 %v1600, %v1728
      %v1785 = vadd.f32 %v1601, %v1731
      %v1786 = vadd.f32 %v1602, %v1736
      %v1787 = vadd.f32 %v1603, %v1739
      %v1788 = vadd.f32 %v1604, %v1744
      %v1789 = vadd.f32 %v1605, %v1747
      %v1790 = vadd.f32 %v1606, %v1752
      %v1791 = vadd.f32 %v1607, %v1755
      %v1792 = vadd.f32 %v1608, %v1760
      %v1793 = vadd.f32 %v1609, %v1763
      %s1794 = scalar_lea.vmem %s1, 28
      %v1795 = vld [vmem:[%s1794] sm:$0xf]
      %v1797 = vunpack.c.l.b16 %v227
      %v1798 = vpack.c.b16 %v1797, %v1797
      %v1799 = vshll.u32 %v1614, 16
      %v1801 = vrot.slane %v1799, 1
      %v1802 = vsel %vm304, %v1234, %v1801
      %v1803 = vshrl.u32 %v1614, 16
      %v1805 = vor.u32 %v1803, %v1801
      %v1807 = vshll.u32 %v1798, 16
      %v1809 = vrot.slane %v1807, 1
      %v1810 = vsel %vm304, %v1805, %v1809
      %v1812 = vsel %vm421, %v1802, 0
      %v1815 = vsel %vm421, %v1810, 0
      %v1818 = vsel %vm464, %v1795, 0
      %1820 = vmatprep.subr.bf16.mxu0 0
      %1821 = vmatpush1.bf16.msra.mxu0 %v1818
      %1822 = vmatprep.subr.bf16.mxu0 0
      %1823 = vmatpush1.bf16.msra.mxu0 0
      %1824 = vmatprep.subr.bf16.mxu0 0
      %1825 = vmatpush1.bf16.msra.mxu0 0
      %1826 = vmatprep.subr.bf16.mxu0 0
      %1827 = vmatpush1.bf16.msra.mxu0 0
      %1828 = vmatprep.subr.bf16.mxu0 0
      %1829 = vmatpush1.bf16.msra.mxu0 0
      %1830 = vmatprep.subr.bf16.mxu0 0
      %1831 = vmatpush1.bf16.msra.mxu0 0
      %1832 = vmatprep.subr.bf16.mxu0 0
      %1833 = vmatpush1.bf16.msra.mxu0 0
      %1834 = vmatprep.subr.bf16.mxu0 0
      %1835 = vmatpush1.bf16.msra.mxu0 0
      %1836 = vmatprep.subr.bf16.mxu0 0
      %1837 = vmatpush1.bf16.msra.mxu0 0
      %1838 = vmatprep.subr.bf16.mxu0 0
      %1839 = vmatpush1.bf16.msra.mxu0 0
      %1840 = vmatprep.subr.bf16.mxu0 0
      %1841 = vmatpush1.bf16.msra.mxu0 0
      %1842 = vmatprep.subr.bf16.mxu0 0
      %1843 = vmatpush1.bf16.msra.mxu0 0
      %1844 = vmatprep.subr.bf16.mxu0 0
      %1845 = vmatpush1.bf16.msra.mxu0 0
      %1846 = vmatprep.subr.bf16.mxu0 0
      %1847 = vmatpush1.bf16.msra.mxu0 0
      %1848 = vmatprep.subr.bf16.mxu0 0
      %1849 = vmatpush1.bf16.msra.mxu0 0
      %1850 = vmatprep.subr.bf16.mxu0 0
      %1851 = vmatpush1.bf16.msra.mxu0 0
      %1852 = vmatprep.mubr.bf16.mxu0 0
      %1853 = vmatmul.mubr.bf16.gmra.mrb[0].mxu0 %v429
      %v1854 = vpop.f32.mrb[0].mxu0
      %v1855 = vadd.f32 0.0, %v1854
      %v1856 = vpop.f32.mrb[0].mxu0
      %v1857 = vpop.f32.mrb[0].mxu0
      %v1858 = vadd.f32 0.0, %v1857
      %v1859 = vpop.f32.mrb[0].mxu0
      %1860 = vmatprep.mubr.bf16.mxu0 0
      %1861 = vmatmul.mubr.bf16.gmra.mrb[0].mxu0 %v432
      %v1862 = vpop.f32.mrb[0].mxu0
      %v1863 = vadd.f32 0.0, %v1862
      %v1864 = vpop.f32.mrb[0].mxu0
      %v1865 = vpop.f32.mrb[0].mxu0
      %v1866 = vadd.f32 0.0, %v1865
      %v1867 = vpop.f32.mrb[0].mxu0
      %1868 = vmatprep.mubr.bf16.mxu0 0
      %1869 = vmatmul.mubr.bf16.gmra.mrb[0].mxu0 %v435
      %v1870 = vpop.f32.mrb[0].mxu0
      %v1871 = vadd.f32 0.0, %v1870
      %v1872 = vpop.f32.mrb[0].mxu0
      %v1873 = vpop.f32.mrb[0].mxu0
      %v1874 = vadd.f32 0.0, %v1873
      %v1875 = vpop.f32.mrb[0].mxu0
      %1876 = vmatprep.mubr.bf16.mxu0 0
      %1877 = vmatmul.mubr.bf16.gmra.mrb[0].mxu0 %v438
      %v1878 = vpop.f32.mrb[0].mxu0
      %v1879 = vadd.f32 0.0, %v1878
      %v1880 = vpop.f32.mrb[0].mxu0
      %v1881 = vpop.f32.mrb[0].mxu0
      %v1882 = vadd.f32 0.0, %v1881
      %v1883 = vpop.f32.mrb[0].mxu0
      %1884 = vmatprep.mubr.bf16.mxu0 0
      %1885 = vmatmul.mubr.bf16.gmra.mrb[0].mxu0 %v441
      %v1886 = vpop.f32.mrb[0].mxu0
      %v1887 = vadd.f32 0.0, %v1886
      %v1888 = vpop.f32.mrb[0].mxu0
      %v1889 = vpop.f32.mrb[0].mxu0
      %v1890 = vadd.f32 0.0, %v1889
      %v1891 = vpop.f32.mrb[0].mxu0
      %1892 = vmatprep.mubr.bf16.mxu0 0
      %1893 = vmatmul.mubr.bf16.gmra.mrb[0].mxu0 %v444
      %v1894 = vpop.f32.mrb[0].mxu0
      %v1895 = vadd.f32 0.0, %v1894
      %v1896 = vpop.f32.mrb[0].mxu0
      %v1897 = vpop.f32.mrb[0].mxu0
      %v1898 = vadd.f32 0.0, %v1897
      %v1899 = vpop.f32.mrb[0].mxu0
      %1900 = vmatprep.mubr.bf16.mxu0 0
      %1901 = vmatmul.mubr.bf16.gmra.mrb[0].mxu0 %v447
      %v1902 = vpop.f32.mrb[0].mxu0
      %v1903 = vadd.f32 0.0, %v1902
      %v1904 = vpop.f32.mrb[0].mxu0
      %v1905 = vpop.f32.mrb[0].mxu0
      %v1906 = vadd.f32 0.0, %v1905
      %v1907 = vpop.f32.mrb[0].mxu0
      %1908 = vmatprep.mubr.bf16.mxu0 0
      %1909 = vmatmul.mubr.bf16.gmra.mrb[0].mxu0 %v450
      %v1910 = vpop.f32.mrb[0].mxu0
      %v1911 = vadd.f32 0.0, %v1910
      %v1912 = vpop.f32.mrb[0].mxu0
      %v1913 = vpop.f32.mrb[0].mxu0
      %v1914 = vadd.f32 0.0, %v1913
      %v1915 = vpop.f32.mrb[0].mxu0
      %1916 = vmatprep.mubr.bf16.mxu0 0
      %1917 = vmatmul.mubr.bf16.gmra.mrb[0].mxu0 %v453
      %v1918 = vpop.f32.mrb[0].mxu0
      %v1919 = vadd.f32 0.0, %v1918
      %v1920 = vpop.f32.mrb[0].mxu0
      %v1921 = vpop.f32.mrb[0].mxu0
      %v1922 = vadd.f32 0.0, %v1921
      %v1923 = vpop.f32.mrb[0].mxu0
      %1924 = vmatprep.mubr.bf16.mxu0 0
      %1925 = vmatmul.mubr.bf16.gmra.mrb[0].mxu0 %v456
      %v1926 = vpop.f32.mrb[0].mxu0
      %v1927 = vadd.f32 0.0, %v1926
      %v1928 = vpop.f32.mrb[0].mxu0
      %v1929 = vpop.f32.mrb[0].mxu0
      %v1930 = vadd.f32 0.0, %v1929
      %v1931 = vpop.f32.mrb[0].mxu0
      %1932 = vmatprep.mubr.bf16.mxu0 0
      %1933 = vmatmul.mubr.bf16.gmra.mrb[0].mxu0 %v459
      %v1934 = vpop.f32.mrb[0].mxu0
      %v1935 = vadd.f32 0.0, %v1934
      %v1936 = vpop.f32.mrb[0].mxu0
      %v1937 = vpop.f32.mrb[0].mxu0
      %v1938 = vadd.f32 0.0, %v1937
      %v1939 = vpop.f32.mrb[0].mxu0
      %1940 = vmatprep.mubr.bf16.mxu0 0
      %1941 = vmatmul.mubr.bf16.gmra.mrb[0].mxu0 %v1241
      %v1942 = vpop.f32.mrb[0].mxu0
      %v1943 = vadd.f32 0.0, %v1942
      %v1944 = vpop.f32.mrb[0].mxu0
      %v1945 = vpop.f32.mrb[0].mxu0
      %v1946 = vadd.f32 0.0, %v1945
      %v1947 = vpop.f32.mrb[0].mxu0
      %1948 = vmatprep.mubr.bf16.mxu0 0
      %1949 = vmatmul.mubr.bf16.gmra.mrb[0].mxu0 %v1812
      %v1950 = vpop.f32.mrb[0].mxu0
      %v1951 = vadd.f32 0.0, %v1950
      %v1952 = vpop.f32.mrb[0].mxu0
      %v1953 = vpop.f32.mrb[0].mxu0
      %v1954 = vadd.f32 0.0, %v1953
      %v1955 = vpop.f32.mrb[0].mxu0
      %1956 = vmatprep.mubr.bf16.mxu0 0
      %1957 = vmatmul.mubr.bf16.gmra.mrb[0].mxu0 %v1815
      %v1958 = vpop.f32.mrb[0].mxu0
      %v1959 = vadd.f32 0.0, %v1958
      %v1960 = vpop.f32.mrb[0].mxu0
      %v1961 = vpop.f32.mrb[0].mxu0
      %v1962 = vadd.f32 0.0, %v1961
      %v1963 = vpop.f32.mrb[0].mxu0
      %1964 = vdwg.mxu0
      %v1965 = vadd.f32 %v1766, %v1855
      %v1966 = vadd.f32 %v1767, %v1858
      %v1967 = vadd.f32 %v1768, %v1863
      %v1968 = vadd.f32 %v1769, %v1866
      %v1969 = vadd.f32 %v1770, %v1871
      %v1970 = vadd.f32 %v1771, %v1874
      %v1971 = vadd.f32 %v1772, %v1879
      %v1972 = vadd.f32 %v1773, %v1882
      %v1973 = vadd.f32 %v1774, %v1887
      %v1974 = vadd.f32 %v1775, %v1890
      %v1975 = vadd.f32 %v1776, %v1895
      %v1976 = vadd.f32 %v1777, %v1898
      %v1977 = vadd.f32 %v1778, %v1903
      %v1978 = vadd.f32 %v1779, %v1906
      %v1979 = vadd.f32 %v1780, %v1911
      %v1980 = vadd.f32 %v1781, %v1914
      %v1981 = vadd.f32 %v1782, %v1919
      %v1982 = vadd.f32 %v1783, %v1922
      %v1983 = vadd.f32 %v1784, %v1927
      %v1984 = vadd.f32 %v1785, %v1930
      %v1985 = vadd.f32 %v1786, %v1935
      %v1986 = vadd.f32 %v1787, %v1938
      %v1987 = vadd.f32 %v1788, %v1943
      %v1988 = vadd.f32 %v1789, %v1946
      %v1989 = vadd.f32 %v1790, %v1951
      %v1990 = vadd.f32 %v1791, %v1954
      %v1991 = vadd.f32 %v1792, %v1959
      %v1992 = vadd.f32 %v1793, %v1962
      %s1993 = scalar_lea.vmem %s1, 32
      %v1994 = vld [vmem:[%s1993] sm:$0xf]
      %v1995 = vrot.slane %v1614, 1
      %v1996 = vsel %vm791, %v1424, %v1995
      %v1997 = vrot.slane %v1798, 1
      %v1998 = vsel %vm791, %v1995, %v1997
      %v2000 = vsel %vm421, %v1996, 0
      %v2003 = vsel %vm421, %v1998, 0
      %v2006 = vsel %vm464, %v1994, 0
      %2008 = vmatprep.subr.bf16.mxu0 0
      %2009 = vmatpush1.bf16.msra.mxu0 %v2006
      %2010 = vmatprep.subr.bf16.mxu0 0
      %2011 = vmatpush1.bf16.msra.mxu0 0
      %2012 = vmatprep.subr.bf16.mxu0 0
      %2013 = vmatpush1.bf16.msra.mxu0 0
      %2014 = vmatprep.subr.bf16.mxu0 0
      %2015 = vmatpush1.bf16.msra.mxu0 0
      %2016 = vmatprep.subr.bf16.mxu0 0
      %2017 = vmatpush1.bf16.msra.mxu0 0
      %2018 = vmatprep.subr.bf16.mxu0 0
      %2019 = vmatpush1.bf16.msra.mxu0 0
      %2020 = vmatprep.subr.bf16.mxu0 0
      %2021 = vmatpush1.bf16.msra.mxu0 0
      %2022 = vmatprep.subr.bf16.mxu0 0
      %2023 = vmatpush1.bf16.msra.mxu0 0
      %2024 = vmatprep.subr.bf16.mxu0 0
      %2025 = vmatpush1.bf16.msra.mxu0 0
      %2026 = vmatprep.subr.bf16.mxu0 0
      %2027 = vmatpush1.bf16.msra.mxu0 0
      %2028 = vmatprep.subr.bf16.mxu0 0
      %2029 = vmatpush1.bf16.msra.mxu0 0
      %2030 = vmatprep.subr.bf16.mxu0 0
      %2031 = vmatpush1.bf16.msra.mxu0 0
      %2032 = vmatprep.subr.bf16.mxu0 0
      %2033 = vmatpush1.bf16.msra.mxu0 0
      %2034 = vmatprep.subr.bf16.mxu0 0
      %2035 = vmatpush1.bf16.msra.mxu0 0
      %2036 = vmatprep.subr.bf16.mxu0 0
      %2037 = vmatpush1.bf16.msra.mxu0 0
      %2038 = vmatprep.subr.bf16.mxu0 0
      %2039 = vmatpush1.bf16.msra.mxu0 0
      %2040 = vmatprep.mubr.bf16.mxu0 0
      %2041 = vmatmul.mubr.bf16.gmra.mrb[0].mxu0 %v828
      %v2042 = vpop.f32.mrb[0].mxu0
      %v2043 = vadd.f32 0.0, %v2042
      %v2044 = vpop.f32.mrb[0].mxu0
      %v2045 = vpop.f32.mrb[0].mxu0
      %v2046 = vadd.f32 0.0, %v2045
      %v2047 = vpop.f32.mrb[0].mxu0
      %2048 = vmatprep.mubr.bf16.mxu0 0
      %2049 = vmatmul.mubr.bf16.gmra.mrb[0].mxu0 %v831
      %v2050 = vpop.f32.mrb[0].mxu0
      %v2051 = vadd.f32 0.0, %v2050
      %v2052 = vpop.f32.mrb[0].mxu0
      %v2053 = vpop.f32.mrb[0].mxu0
      %v2054 = vadd.f32 0.0, %v2053
      %v2055 = vpop.f32.mrb[0].mxu0
      %2056 = vmatprep.mubr.bf16.mxu0 0
      %2057 = vmatmul.mubr.bf16.gmra.mrb[0].mxu0 %v834
      %v2058 = vpop.f32.mrb[0].mxu0
      %v2059 = vadd.f32 0.0, %v2058
      %v2060 = vpop.f32.mrb[0].mxu0
      %v2061 = vpop.f32.mrb[0].mxu0
      %v2062 = vadd.f32 0.0, %v2061
      %v2063 = vpop.f32.mrb[0].mxu0
      %2064 = vmatprep.mubr.bf16.mxu0 0
      %2065 = vmatmul.mubr.bf16.gmra.mrb[0].mxu0 %v837
      %v2066 = vpop.f32.mrb[0].mxu0
      %v2067 = vadd.f32 0.0, %v2066
      %v2068 = vpop.f32.mrb[0].mxu0
      %v2069 = vpop.f32.mrb[0].mxu0
      %v2070 = vadd.f32 0.0, %v2069
      %v2071 = vpop.f32.mrb[0].mxu0
      %2072 = vmatprep.mubr.bf16.mxu0 0
      %2073 = vmatmul.mubr.bf16.gmra.mrb[0].mxu0 %v840
      %v2074 = vpop.f32.mrb[0].mxu0
      %v2075 = vadd.f32 0.0, %v2074
      %v2076 = vpop.f32.mrb[0].mxu0
      %v2077 = vpop.f32.mrb[0].mxu0
      %v2078 = vadd.f32 0.0, %v2077
      %v2079 = vpop.f32.mrb[0].mxu0
      %2080 = vmatprep.mubr.bf16.mxu0 0
      %2081 = vmatmul.mubr.bf16.gmra.mrb[0].mxu0 %v843
      %v2082 = vpop.f32.mrb[0].mxu0
      %v2083 = vadd.f32 0.0, %v2082
      %v2084 = vpop.f32.mrb[0].mxu0
      %v2085 = vpop.f32.mrb[0].mxu0
      %v2086 = vadd.f32 0.0, %v2085
      %v2087 = vpop.f32.mrb[0].mxu0
      %2088 = vmatprep.mubr.bf16.mxu0 0
      %2089 = vmatmul.mubr.bf16.gmra.mrb[0].mxu0 %v846
      %v2090 = vpop.f32.mrb[0].mxu0
      %v2091 = vadd.f32 0.0, %v2090
      %v2092 = vpop.f32.mrb[0].mxu0
      %v2093 = vpop.f32.mrb[0].mxu0
      %v2094 = vadd.f32 0.0, %v2093
      %v2095 = vpop.f32.mrb[0].mxu0
      %2096 = vmatprep.mubr.bf16.mxu0 0
      %2097 = vmatmul.mubr.bf16.gmra.mrb[0].mxu0 %v849
      %v2098 = vpop.f32.mrb[0].mxu0
      %v2099 = vadd.f32 0.0, %v2098
      %v2100 = vpop.f32.mrb[0].mxu0
      %v2101 = vpop.f32.mrb[0].mxu0
      %v2102 = vadd.f32 0.0, %v2101
      %v2103 = vpop.f32.mrb[0].mxu0
      %2104 = vmatprep.mubr.bf16.mxu0 0
      %2105 = vmatmul.mubr.bf16.gmra.mrb[0].mxu0 %v852
      %v2106 = vpop.f32.mrb[0].mxu0
      %v2107 = vadd.f32 0.0, %v2106
      %v2108 = vpop.f32.mrb[0].mxu0
      %v2109 = vpop.f32.mrb[0].mxu0
      %v2110 = vadd.f32 0.0, %v2109
      %v2111 = vpop.f32.mrb[0].mxu0
      %2112 = vmatprep.mubr.bf16.mxu0 0
      %2113 = vmatmul.mubr.bf16.gmra.mrb[0].mxu0 %v855
      %v2114 = vpop.f32.mrb[0].mxu0
      %v2115 = vadd.f32 0.0, %v2114
      %v2116 = vpop.f32.mrb[0].mxu0
      %v2117 = vpop.f32.mrb[0].mxu0
      %v2118 = vadd.f32 0.0, %v2117
      %v2119 = vpop.f32.mrb[0].mxu0
      %2120 = vmatprep.mubr.bf16.mxu0 0
      %2121 = vmatmul.mubr.bf16.gmra.mrb[0].mxu0 %v858
      %v2122 = vpop.f32.mrb[0].mxu0
      %v2123 = vadd.f32 0.0, %v2122
      %v2124 = vpop.f32.mrb[0].mxu0
      %v2125 = vpop.f32.mrb[0].mxu0
      %v2126 = vadd.f32 0.0, %v2125
      %v2127 = vpop.f32.mrb[0].mxu0
      %2128 = vmatprep.mubr.bf16.mxu0 0
      %2129 = vmatmul.mubr.bf16.gmra.mrb[0].mxu0 %v1429
      %v2130 = vpop.f32.mrb[0].mxu0
      %v2131 = vadd.f32 0.0, %v2130
      %v2132 = vpop.f32.mrb[0].mxu0
      %v2133 = vpop.f32.mrb[0].mxu0
      %v2134 = vadd.f32 0.0, %v2133
      %v2135 = vpop.f32.mrb[0].mxu0
      %2136 = vmatprep.mubr.bf16.mxu0 0
      %2137 = vmatmul.mubr.bf16.gmra.mrb[0].mxu0 %v2000
      %v2138 = vpop.f32.mrb[0].mxu0
      %v2139 = vadd.f32 0.0, %v2138
      %v2140 = vpop.f32.mrb[0].mxu0
      %v2141 = vpop.f32.mrb[0].mxu0
      %v2142 = vadd.f32 0.0, %v2141
      %v2143 = vpop.f32.mrb[0].mxu0
      %2144 = vmatprep.mubr.bf16.mxu0 0
      %2145 = vmatmul.mubr.bf16.gmra.mrb[0].mxu0 %v2003
      %v2146 = vpop.f32.mrb[0].mxu0
      %v2147 = vadd.f32 0.0, %v2146
      %v2148 = vpop.f32.mrb[0].mxu0
      %v2149 = vpop.f32.mrb[0].mxu0
      %v2150 = vadd.f32 0.0, %v2149
      %v2151 = vpop.f32.mrb[0].mxu0
      %2152 = vdwg.mxu0
      %v2153 = vadd.f32 %v1965, %v2043
      %v2154 = vadd.f32 %v1966, %v2046
      %v2155 = vadd.f32 %v1967, %v2051
      %v2156 = vadd.f32 %v1968, %v2054
      %v2157 = vadd.f32 %v1969, %v2059
      %v2158 = vadd.f32 %v1970, %v2062
      %v2159 = vadd.f32 %v1971, %v2067
      %v2160 = vadd.f32 %v1972, %v2070
      %v2161 = vadd.f32 %v1973, %v2075
      %v2162 = vadd.f32 %v1974, %v2078
      %v2163 = vadd.f32 %v1975, %v2083
      %v2164 = vadd.f32 %v1976, %v2086
      %v2165 = vadd.f32 %v1977, %v2091
      %v2166 = vadd.f32 %v1978, %v2094
      %v2167 = vadd.f32 %v1979, %v2099
      %v2168 = vadd.f32 %v1980, %v2102
      %v2169 = vadd.f32 %v1981, %v2107
      %v2170 = vadd.f32 %v1982, %v2110
      %v2171 = vadd.f32 %v1983, %v2115
      %v2172 = vadd.f32 %v1984, %v2118
      %v2173 = vadd.f32 %v1985, %v2123
      %v2174 = vadd.f32 %v1986, %v2126
      %v2175 = vadd.f32 %v1987, %v2131
      %v2176 = vadd.f32 %v1988, %v2134
      %v2177 = vadd.f32 %v1989, %v2139
      %v2178 = vadd.f32 %v1990, %v2142
      %v2179 = vadd.f32 %v1991, %v2147
      %v2180 = vadd.f32 %v1992, %v2150
      %v2181 = vld [vmem:[%s2] sm:$0x1]
      %v2183 = vlaneseq
      %v2184 = vshrl.u32 %v2183, 7
      %v2185 = vsub.s32 0, %v2184
      %v2186 = vrot.slane %v2181, %v2185
      %v2188 = vadd.f32 %v2153, %v2186
      %v2189 = vadd.f32 %v2154, %v2186
      %v2190 = vadd.f32 %v2155, %v2186
      %v2191 = vadd.f32 %v2156, %v2186
      %v2192 = vadd.f32 %v2157, %v2186
      %v2193 = vadd.f32 %v2158, %v2186
      %v2194 = vadd.f32 %v2159, %v2186
      %v2195 = vadd.f32 %v2160, %v2186
      %v2196 = vadd.f32 %v2161, %v2186
      %v2197 = vadd.f32 %v2162, %v2186
      %v2198 = vadd.f32 %v2163, %v2186
      %v2199 = vadd.f32 %v2164, %v2186
      %v2200 = vadd.f32 %v2165, %v2186
      %v2201 = vadd.f32 %v2166, %v2186
      %v2202 = vadd.f32 %v2167, %v2186
      %v2203 = vadd.f32 %v2168, %v2186
      %v2204 = vadd.f32 %v2169, %v2186
      %v2205 = vadd.f32 %v2170, %v2186
      %v2206 = vadd.f32 %v2171, %v2186
      %v2207 = vadd.f32 %v2172, %v2186
      %v2208 = vadd.f32 %v2173, %v2186
      %v2209 = vadd.f32 %v2174, %v2186
      %v2210 = vadd.f32 %v2175, %v2186
      %v2211 = vadd.f32 %v2176, %v2186
      %v2212 = vadd.f32 %v2177, %v2186
      %v2213 = vadd.f32 %v2178, %v2186
      %v2214 = vadd.f32 %v2179, %v2186
      %v2215 = vadd.f32 %v2180, %v2186
      %2216 = vst.msk [vmem:[%s192] sm:$0xff] %vm421, %v2188
      %2217 = vst.msk [vmem:[%s192 + $0x8] sm:$0xff] %vm421, %v2189
      %2218 = vst.msk [vmem:[%s192 + $0x10] sm:$0xff] %vm421, %v2190
      %2219 = vst.msk [vmem:[%s192 + $0x18] sm:$0xff] %vm421, %v2191
      %2220 = vst.msk [vmem:[%s192 + $0x20] sm:$0xff] %vm421, %v2192
      %2221 = vst.msk [vmem:[%s192 + $0x28] sm:$0xff] %vm421, %v2193
      %2222 = vst.msk [vmem:[%s192 + $0x30] sm:$0xff] %vm421, %v2194
      %2223 = vst.msk [vmem:[%s192 + $0x38] sm:$0xff] %vm421, %v2195
      %2224 = vst.msk [vmem:[%s192 + $0x40] sm:$0xff] %vm421, %v2196
      %2225 = vst.msk [vmem:[%s192 + $0x48] sm:$0xff] %vm421, %v2197
      %2226 = vst.msk [vmem:[%s192 + $0x50] sm:$0xff] %vm421, %v2198
      %2227 = vst.msk [vmem:[%s192 + $0x58] sm:$0xff] %vm421, %v2199
      %2228 = vst.msk [vmem:[%s192 + $0x60] sm:$0xff] %vm421, %v2200
      %2229 = vst.msk [vmem:[%s192 + $0x68] sm:$0xff] %vm421, %v2201
      %2230 = vst.msk [vmem:[%s192 + $0x70] sm:$0xff] %vm421, %v2202
      %2231 = vst.msk [vmem:[%s192 + $0x78] sm:$0xff] %vm421, %v2203
      %2232 = vst.msk [vmem:[%s192 + $0x80] sm:$0xff] %vm421, %v2204
      %2233 = vst.msk [vmem:[%s192 + $0x88] sm:$0xff] %vm421, %v2205
      %2234 = vst.msk [vmem:[%s192 + $0x90] sm:$0xff] %vm421, %v2206
      %2235 = vst.msk [vmem:[%s192 + $0x98] sm:$0xff] %vm421, %v2207
      %2236 = vst.msk [vmem:[%s192 + $0xa0] sm:$0xff] %vm421, %v2208
      %2237 = vst.msk [vmem:[%s192 + $0xa8] sm:$0xff] %vm421, %v2209
      %2238 = vst.msk [vmem:[%s192 + $0xb0] sm:$0xff] %vm421, %v2210
      %2239 = vst.msk [vmem:[%s192 + $0xb8] sm:$0xff] %vm421, %v2211
      %2240 = vst.msk [vmem:[%s192 + $0xc0] sm:$0xff] %vm421, %v2212
      %2241 = vst.msk [vmem:[%s192 + $0xc8] sm:$0xff] %vm421, %v2213
      %2242 = vst.msk [vmem:[%s192 + $0xd0] sm:$0xff] %vm421, %v2214
      %2243 = vst.msk [vmem:[%s192 + $0xd8] sm:$0xff] %vm421, %v2215
      %s2244 = smul.u32 28, %s19
      %p2245 = scmp.lt.s32.totalorder %s18, 1
      %s2246 = scalar_select %p2245, %s18, 1
      %p2247 = scmp.lt.s32.totalorder %s2244, 27
      %s2248 = scalar_select %p2247, %s2244, 27
      %s2249 = smul.addr %s2246, 28
      %s2250 = sadd.s32 %s2248, %s2249
      %s2251 = smul.addr %s2250, 8
      %s2252 = scalar_lea.vmem %s3, %s2251
      // Predicated region
      $region33: #{complex_conv2d.1} parent=31 // pred_check
        %p2253 = pneg %p114
      $region34: #{complex_conv2d.1} parent=31 // pred_check_branch
        %2255 = sbr.rel (%p2253) target = $region36
      $region35: #{complex_conv2d.1} parent=31 // pred_region
        %s2256 = smul.u32 28, %s19
      $region36: #{complex_conv2d.1} parent=31 // pred_fallthru
        _
    $region32: #{complex_conv2d.1} parent=5 // pred_fallthru
      _
    %p2257 = scmp.le.s32.totalorder 2, %s9
    // Predicated region
    $region37: #{complex_conv2d.1} parent=5 // pred_check
      %p2258 = pneg %p2257
    $region38: #{complex_conv2d.1} parent=5 // pred_check_branch
      %2260 = sbr.rel (%p2258) target = $region40
    $region39: #{complex_conv2d.1} parent=5 // pred_region
      %s2261 = ssub.s32 %s9, 2
      // Predicated region
      $region41: #{complex_conv2d.1} parent=39 // pred_check
        %p2262 = pneg %p120
      $region42: #{complex_conv2d.1} parent=39 // pred_check_branch
        %2264 = sbr.rel (%p2262) target = $region44
      $region43: #{complex_conv2d.1} parent=39 // pred_region
        %s2265 = smul.u32 28, %s21
        %p2266 = scmp.lt.s32.totalorder %s20, 1
        %s2267 = scalar_select %p2266, %s20, 1
        %p2268 = scmp.lt.s32.totalorder %s2265, 27
        %s2269 = scalar_select %p2268, %s2265, 27
        %s2270 = smul.addr %s2267, 28
        %s2271 = sadd.s32 %s2269, %s2270
        %s2272 = smul.addr %s2271, 8
        %s2273 = scalar_lea.vmem %s3, %s2272
      $region44: #{complex_conv2d.1} parent=39 // pred_fallthru
        _
    $region40: #{complex_conv2d.1} parent=5 // pred_fallthru
      _
  $region6: #{complex_conv2d.1} parent=0 // loop_footer
    %s13 = sadd.s32 1, %s9
  $region7: #{complex_conv2d.1} parent=0 // loop_footer_branch
    %8 = sbr.rel target = $region3
  $region8: #{complex_conv2d.1} parent=0 // loop_exit
    _

</llo_original>
